<compile_context>
chip_gen: v6e
topology: v6e:2x2x1
jax: 0.10.0
libtpu: 0.0.40
codegen_flags: <defaults>
</compile_context>

<pallas_src>
import functools

import jax
import jax.numpy as jnp
from jax.experimental import pallas as pl
from jax.experimental.pallas import tpu as pltpu

EPS = 1e-5
COMPUTE_DTYPE = jnp.bfloat16            # MXU operand / activation storage dtype
VMEM_LIMIT_BYTES = 32 * 1024 * 1024     # safe on v5e/v6e/v7x at these tile sizes


# ---------------------------------------------------------------------------
# In-kernel helpers
# ---------------------------------------------------------------------------
def _conv3x3_flat(slab, w_t, w_out, m_tile):
    """3x3 conv (padding=1) over a flattened row-block slab.

    slab : [C_in, (tile_h+2)*w_out + 2]  row-major flattened activation with one
           halo row above/below (H zero-padding included) and 1 flat element on
           each side.  Flat offset q <-> (padded_row, col) = divmod(q - 1, w_out).
    w_t  : [C_out, 9*C_in] ordered (dy, dx, c_in).
    Returns f32 [C_out, m_tile].
    """
    col = jax.lax.broadcasted_iota(jnp.int32, (1, m_tile), 1) % w_out
    keep_left = (col != 0).astype(slab.dtype)             # dx == 0 taps
    keep_right = (col != (w_out - 1)).astype(slab.dtype)  # dx == 2 taps

    taps = []
    for dy in range(3):
        for dx in range(3):
            off = dy * w_out + dx
            t = slab[:, off:off + m_tile]                 # [C_in, m_tile]
            # Re-introduce the W zero-padding that the flat layout drops
            # (taps that wrapped across a row boundary must contribute 0).
            if dx == 0:
                t = t * keep_left
            elif dx == 2:
                t = t * keep_right
            taps.append(t)
    patches_t = jnp.concatenate(taps, axis=0)             # [9*C_in, m_tile] (VMEM)
    return jnp.dot(w_t, patches_t, preferred_element_type=jnp.float32)


def _write_out_and_stats(acc, y_ref, stats_ref):
    y_ref[...] = acc.astype(y_ref.dtype)
    s = jnp.sum(acc, axis=1, keepdims=True)               # [C_out, 1]
    ss = jnp.sum(acc * acc, axis=1, keepdims=True)        # [C_out, 1]
    stats_ref[...] = jnp.concatenate([s, ss], axis=1)     # [C_out, 2]


def _conv_kernel(slab_ref, w_ref, y_ref, stats_ref, *, w_out, m_tile):
    """conv3x3 (raw output, no bias) + per-block BN partial statistics."""
    acc = _conv3x3_flat(slab_ref[...], w_ref[...], w_out, m_tile)
    _write_out_and_stats(acc, y_ref, stats_ref)


def _act_conv_kernel(slab_ref, w_ref, scale_ref, shift_ref, y_ref, stats_ref,
                     *, w_out, m_tile, m_img):
    """(BN + ReLU of previous layer, fused on the input slab) -> conv3x3 -> stats."""
    hb = pl.program_id(1)
    slab = slab_ref[...].astype(jnp.float32)              # [C, slab_len]
    a = jnp.maximum(slab * scale_ref[...] + shift_ref[...], 0.0)

    # Spatial zero-padding must hold *after* BN+ReLU: zero out every slab
    # position whose global flat offset is a padding position.
    slab_len = slab.shape[1]
    q = jax.lax.broadcasted_iota(jnp.int32, (1, slab_len), 1) + hb * m_tile
    valid = (q >= w_out + 1) & (q < w_out + 1 + m_img)
    a = (a * valid.astype(jnp.float32)).astype(COMPUTE_DTYPE)

    acc = _conv3x3_flat(a, w_ref[...], w_out, m_tile)
    _write_out_and_stats(acc, y_ref, stats_ref)


def _bn_relu_kernel(y_ref, scale_ref, shift_ref, o_ref):
    y = y_ref[...].astype(jnp.float32)                    # [C_out, m_tile]
    o_ref[...] = jnp.maximum(y * scale_ref[...] + shift_ref[...], 0.0).astype(o_ref.dtype)


# ---------------------------------------------------------------------------
# pallas_call wrappers
# ---------------------------------------------------------------------------
def _conv_layer(slab, w_t, scale, shift, *, pre_act, w_out, tile_h, m_img, cout):
    n, hb_count, cin, slab_len = slab.shape
    m_tile = tile_h * w_out

    if pre_act:
        kernel = functools.partial(_act_conv_kernel, w_out=w_out,
                                   m_tile=m_tile, m_img=m_img)
        extra_inputs = (scale, shift)
        extra_specs = [
            pl.BlockSpec((cin, 1), lambda i, j: (0, 0)),
            pl.BlockSpec((cin, 1), lambda i, j: (0, 0)),
        ]
    else:
        kernel = functools.partial(_conv_kernel, w_out=w_out, m_tile=m_tile)
        extra_inputs = ()
        extra_specs = []

    y_raw, stats = pl.pallas_call(
        kernel,
        grid=(n, hb_count),
        in_specs=[
            pl.BlockSpec((None, None, cin, slab_len), lambda i, j: (i, j, 0, 0)),
            pl.BlockSpec((cout, 9 * cin), lambda i, j: (0, 0)),
            *extra_specs,
        ],
        out_specs=[
            pl.BlockSpec((None, cout, m_tile), lambda i, j: (i, 0, j)),
            pl.BlockSpec((None, None, cout, 2), lambda i, j: (i, j, 0, 0)),
        ],
        out_shape=[
            jax.ShapeDtypeStruct((n, cout, m_img), COMPUTE_DTYPE),
            jax.ShapeDtypeStruct((n, hb_count, cout, 2), jnp.float32),
        ],
        compiler_params=pltpu.CompilerParams(
            dimension_semantics=("parallel", "parallel"),
            vmem_limit_bytes=VMEM_LIMIT_BYTES,
        ),
    )(slab, w_t, *extra_inputs)
    return y_raw, stats


def _bn_relu(y_raw, scale, shift, *, m_tile):
    n, cout, m_img = y_raw.shape
    return pl.pallas_call(
        _bn_relu_kernel,
        grid=(n, m_img // m_tile),
        in_specs=[
            pl.BlockSpec((None, cout, m_tile), lambda i, j: (i, 0, j)),
            pl.BlockSpec((cout, 1), lambda i, j: (0, 0)),
            pl.BlockSpec((cout, 1), lambda i, j: (0, 0)),
        ],
        out_specs=pl.BlockSpec((None, cout, m_tile), lambda i, j: (i, 0, j)),
        out_shape=jax.ShapeDtypeStruct((n, cout, m_img), jnp.float32),
        compiler_params=pltpu.CompilerParams(
            dimension_semantics=("parallel", "parallel"),
            vmem_limit_bytes=VMEM_LIMIT_BYTES,
        ),
    )(y_raw, scale, shift)


# ---------------------------------------------------------------------------
# JAX glue: upsample, slab construction, BN finalization
# ---------------------------------------------------------------------------
def _pick_tile_h(h_out, w_out, target_rows=512):
    """Largest row-block height dividing H with lane-dense (128-multiple) tiles."""
    best = h_out   # fallback: whole image per block (block == full dim, legal)
    for d in range(1, h_out):
        if h_out % d == 0 and (d * w_out) % 128 == 0 and d * w_out <= target_rows:
            best = d
    return best


def _upsample_bilinear_x2_align_corners(x):
    # matches nn.UpsamplingBilinear2d(scale_factor=2) (align_corners=True), NCHW
    n, c, h, w = x.shape
    h2, w2 = 2 * h, 2 * w

    def coords(in_size, out_size):
        if out_size == 1 or in_size == 1:
            src = jnp.zeros((out_size,), jnp.float32)
        else:
            src = jnp.arange(out_size, dtype=jnp.float32) * ((in_size - 1) / (out_size - 1))
        i0 = jnp.clip(jnp.floor(src).astype(jnp.int32), 0, in_size - 1)
        i1 = jnp.clip(i0 + 1, 0, in_size - 1)
        return i0, i1, src - i0.astype(jnp.float32)

    h0, h1, fh = coords(h, h2)
    w0, w1, fw = coords(w, w2)
    xh = x[:, :, h0, :] * (1.0 - fh)[None, None, :, None] + \
         x[:, :, h1, :] * fh[None, None, :, None]
    xw = xh[:, :, :, w0] * (1.0 - fw)[None, None, None, :] + \
         xh[:, :, :, w1] * fw[None, None, None, :]
    return xw


def _build_flat_slabs(x_flat, w_out, tile_h, hb_count):
    """[N, C, H*W] row-major -> [N, HB, C, (tile_h+2)*W + 2] halo row-block slabs."""
    m_tile = tile_h * w_out
    slab_len = (tile_h + 2) * w_out + 2
    g = jnp.pad(x_flat, ((0, 0), (0, 0), (w_out + 1, w_out + 1)))
    idx = jnp.arange(hb_count)[:, None] * m_tile + jnp.arange(slab_len)[None, :]
    slabs = g[:, :, idx]                        # [N, C, HB, slab_len]
    return jnp.transpose(slabs, (0, 2, 1, 3))   # [N, HB, C, slab_len]


def _finalize_bn(stats, gamma, beta, count):
    """Partial (sum, sum_sq) -> per-channel (scale, shift) of training-mode BN."""
    s = jnp.sum(stats[..., 0], axis=(0, 1))                   # [C_out]
    ss = jnp.sum(stats[..., 1], axis=(0, 1))
    mean = s / count
    var = jnp.maximum(ss / count - mean * mean, 0.0)          # biased variance
    scale = gamma.astype(jnp.float32) * jax.lax.rsqrt(var + EPS)
    shift = beta.astype(jnp.float32) - mean * scale
    return scale[:, None], shift[:, None]                     # [C_out, 1] each


# ---------------------------------------------------------------------------
# Module-equivalent forward
# ---------------------------------------------------------------------------
def upsample_conv_forward(x_nchw, other_tensor, params):
    del other_tensor  # unused by the PyTorch forward as well
    n, cin, h, w = x_nchw.shape
    cout = params["w1"].shape[0]
    h_out, w_out = 2 * h, 2 * w
    m_img = h_out * w_out
    tile_h = _pick_tile_h(h_out, w_out)
    hb_count = h_out // tile_h
    m_tile = tile_h * w_out
    count = float(n * m_img)

    # TODO(synk): fuse the fixed 4-tap bilinear x2 upsample into conv1's tap
    # construction instead of materializing the 4x larger tensor first.
    x_up = _upsample_bilinear_x2_align_corners(x_nchw.astype(jnp.float32))
    x_flat = x_up.reshape(n, cin, m_img).astype(COMPUTE_DTYPE)

    # NOTE: conv biases (params["b1"], params["b2"]) are exact no-ops under
    # training-mode BatchNorm (mean subtraction cancels them) and are folded away.

    # --- layer 1: conv1 + batch-statistic accumulation -----------------------
    w1_t = jnp.transpose(params["w1"], (0, 2, 3, 1)).reshape(cout, 9 * cin)
    xslab = _build_flat_slabs(x_flat, w_out, tile_h, hb_count)
    y1_raw, stats1 = _conv_layer(xslab, w1_t.astype(COMPUTE_DTYPE), None, None,
                                 pre_act=False, w_out=w_out, tile_h=tile_h,
                                 m_img=m_img, cout=cout)
    scale1, shift1 = _finalize_bn(stats1, params["gamma1"], params["beta1"], count)

    # --- layer 2: BN1+ReLU1 fused into conv2's input read + conv2 + stats ----
    w2_t = jnp.transpose(params["w2"], (0, 2, 3, 1)).reshape(cout, 9 * cout)
    y1slab = _build_flat_slabs(y1_raw, w_out, tile_h, hb_count)
    y2_raw, stats2 = _conv_layer(y1slab, w2_t.astype(COMPUTE_DTYPE), scale1, shift1,
                                 pre_act=True, w_out=w_out, tile_h=tile_h,
                                 m_img=m_img, cout=cout)
    scale2, shift2 = _finalize_bn(stats2, params["gamma2"], params["beta2"], count)

    # --- final BN2 + ReLU2 (lane-dense pointwise kernel); output is NCHW -----
    out_flat = _bn_relu(y2_raw, scale2, shift2, m_tile=m_tile)
    return out_flat.reshape(n, cout, h_out, w_out)


def init_params(key, in_channels, out_channels):
    ks = jax.random.split(key, 6)
    return {
        "w1": 0.1 * jax.random.normal(ks[0], (out_channels, in_channels, 3, 3), jnp.float32),
        "b1": 0.1 * jax.random.normal(ks[1], (out_channels,), jnp.float32),
        "gamma1": 1.0 + 0.1 * jax.random.normal(ks[2], (out_channels,), jnp.float32),
        "beta1": 0.1 * jax.random.normal(ks[3], (out_channels,), jnp.float32),
        "w2": 0.1 * jax.random.normal(ks[4], (out_channels, out_channels, 3, 3), jnp.float32),
        "b2": 0.1 * jax.random.normal(ks[5], (out_channels,), jnp.float32),
        "gamma2": jnp.ones((out_channels,), jnp.float32),
        "beta2": jnp.zeros((out_channels,), jnp.float32),
    }


# Pure-JAX f32 reference (same semantics as the PyTorch module in training mode).
def _reference_forward(x, params):
    x = _upsample_bilinear_x2_align_corners(x.astype(jnp.float32))

    def block(x, wgt, b, g, bta):
        y = jax.lax.conv_general_dilated(
            x, wgt, (1, 1), ((1, 1), (1, 1)),
            dimension_numbers=("NCHW", "OIHW", "NCHW"))
        y = y + b[None, :, None, None]
        m = jnp.mean(y, axis=(0, 2, 3), keepdims=True)
        v = jnp.mean((y - m) ** 2, axis=(0, 2, 3), keepdims=True)
        y = (y - m) * jax.lax.rsqrt(v + EPS) * g[None, :, None, None] + bta[None, :, None, None]
        return jnp.maximum(y, 0.0)

    x = block(x, params["w1"], params["b1"], params["gamma1"], params["beta1"])
    x = block(x, params["w2"], params["b2"], params["gamma2"], params["beta2"])
    return x


if __name__ == "__main__":
    key = jax.random.PRNGKey(0)
    k_x, k_o, k_p = jax.random.split(key, 3)

    in_channels, out_channels = 4, 8
    n, h, w = 2, 16, 16

    x = jax.random.normal(k_x, (n, in_channels, h, w), jnp.float32)             # NCHW
    other = jax.random.normal(k_o, (n, out_channels, 2 * h, 2 * w), jnp.float32)
    params = init_params(k_p, in_channels, out_channels)

    fwd = jax.jit(upsample_conv_forward)
    out = jax.block_until_ready(fwd(x, other, params))

    assert out.shape == (n, out_channels, 2 * h, 2 * w), out.shape
    assert bool(jnp.all(jnp.isfinite(out))) and bool(jnp.all(out >= 0.0))

    ref = _reference_forward(x, params)
    max_err = float(jnp.max(jnp.abs(out - ref)))
    assert max_err < 0.25, f"max abs error vs f32 reference: {max_err}"

    print("KERNEL_OK")
</pallas_src>

<mosaic_0001>
module attributes {stable_mosaic.version = 11 : i64} {
  func.func @_conv_kernel(%arg0: i32, %arg1: i32, %arg2: memref<1x1x4x578xbf16, #tpu.memory_space<vmem>>, %arg3: memref<8x36xbf16, #tpu.memory_space<vmem>>, %arg4: memref<1x8x512xbf16, #tpu.memory_space<vmem>>, %arg5: memref<1x1x8x2xf32, #tpu.memory_space<vmem>>) attributes {dimension_semantics = [#tpu.dimension_semantics<parallel>, #tpu.dimension_semantics<parallel>], iteration_bounds = array<i64: 2, 2>, scalar_prefetch = 0 : i64, scratch_operands = 0 : i64, tpu.core_type = #tpu.core_type<tc>, window_params = [{transform_indices = @transform_0, window_bounds = array<i64: 1, 1, 4, 578>}, {pipeline_mode = #tpu.pipeline_mode<synchronous>, transform_indices = @transform_1, window_bounds = array<i64: 8, 36>}, {transform_indices = @transform_2, window_bounds = array<i64: 1, 8, 512>}, {transform_indices = @transform_3, window_bounds = array<i64: 1, 1, 8, 2>}]} {
    %c0 = arith.constant 0 : index
    %c0_0 = arith.constant 0 : index
    %c0_1 = arith.constant 0 : index
    %c0_2 = arith.constant 0 : index
    %0 = vector.load %arg2[%c0, %c0_0, %c0_1, %c0_2] : memref<1x1x4x578xbf16, #tpu.memory_space<vmem>>, vector<1x1x4x578xbf16>
    %1 = vector.shape_cast %0 : vector<1x1x4x578xbf16> to vector<4x578xbf16>
    %c0_3 = arith.constant 0 : index
    %c0_4 = arith.constant 0 : index
    %2 = vector.load %arg3[%c0_3, %c0_4] : memref<8x36xbf16, #tpu.memory_space<vmem>>, vector<8x36xbf16>
    %3 = tpu.iota {dimensions = array<i32: 1>} : vector<1x512xi32>
    %c32_i32 = arith.constant 32 : i32
    %c0_i32 = arith.constant 0 : i32
    %4 = arith.cmpi eq, %c32_i32, %c0_i32 : i32
    %c1_i32 = arith.constant 1 : i32
    %5 = arith.select %4, %c1_i32, %c32_i32 : i32
    %6 = vector.broadcast %5 : i32 to vector<1x512xi32>
    %7 = arith.remsi %3, %6 : vector<1x512xi32>
    %c0_i32_5 = arith.constant 0 : i32
    %8 = vector.broadcast %c0_i32_5 : i32 to vector<1x512xi32>
    %9 = arith.cmpi ne, %7, %8 : vector<1x512xi32>
    %c0_i32_6 = arith.constant 0 : i32
    %10 = vector.broadcast %c0_i32_6 : i32 to vector<1x512xi32>
    %11 = arith.cmpi slt, %7, %10 : vector<1x512xi32>
    %c0_i32_7 = arith.constant 0 : i32
    %12 = arith.cmpi slt, %5, %c0_i32_7 : i32
    %13 = vector.broadcast %12 : i1 to vector<1x512xi1>
    %14 = vector.broadcast %13 : vector<1x512xi1> to vector<1x512xi1>
    %15 = arith.xori %11, %14 : vector<1x512xi1>
    %16 = arith.andi %15, %9 : vector<1x512xi1>
    %17 = vector.broadcast %5 : i32 to vector<1x512xi32>
    %18 = arith.addi %7, %17 : vector<1x512xi32>
    %19 = arith.select %16, %18, %7 : vector<1x512xi1>, vector<1x512xi32>
    %c0_i32_8 = arith.constant 0 : i32
    %20 = vector.broadcast %c0_i32_8 : i32 to vector<1x512xi32>
    %21 = arith.cmpi ne, %19, %20 : vector<1x512xi32>
    %22 = arith.extui %21 : vector<1x512xi1> to vector<1x512xi32>
    %23 = arith.sitofp %22 : vector<1x512xi32> to vector<1x512xf32>
    %24 = arith.truncf %23 : vector<1x512xf32> to vector<1x512xbf16>
    %c31_i32 = arith.constant 31 : i32
    %25 = vector.broadcast %c31_i32 : i32 to vector<1x512xi32>
    %26 = arith.cmpi ne, %19, %25 : vector<1x512xi32>
    %27 = arith.extui %26 : vector<1x512xi1> to vector<1x512xi32>
    %28 = arith.sitofp %27 : vector<1x512xi32> to vector<1x512xf32>
    %29 = arith.truncf %28 : vector<1x512xf32> to vector<1x512xbf16>
    %30 = vector.extract_strided_slice %1 {offsets = [0, 0], sizes = [4, 512], strides = [1, 1]} : vector<4x578xbf16> to vector<4x512xbf16>
    %31 = vector.broadcast %24 : vector<1x512xbf16> to vector<4x512xbf16>
    %32 = arith.mulf %30, %31 : vector<4x512xbf16>
    %33 = vector.extract_strided_slice %1 {offsets = [0, 1], sizes = [4, 512], strides = [1, 1]} : vector<4x578xbf16> to vector<4x512xbf16>
    %34 = vector.extract_strided_slice %1 {offsets = [0, 2], sizes = [4, 512], strides = [1, 1]} : vector<4x578xbf16> to vector<4x512xbf16>
    %35 = vector.broadcast %29 : vector<1x512xbf16> to vector<4x512xbf16>
    %36 = arith.mulf %34, %35 : vector<4x512xbf16>
    %37 = vector.extract_strided_slice %1 {offsets = [0, 32], sizes = [4, 512], strides = [1, 1]} : vector<4x578xbf16> to vector<4x512xbf16>
    %38 = vector.broadcast %24 : vector<1x512xbf16> to vector<4x512xbf16>
    %39 = arith.mulf %37, %38 : vector<4x512xbf16>
    %40 = vector.extract_strided_slice %1 {offsets = [0, 33], sizes = [4, 512], strides = [1, 1]} : vector<4x578xbf16> to vector<4x512xbf16>
    %41 = vector.extract_strided_slice %1 {offsets = [0, 34], sizes = [4, 512], strides = [1, 1]} : vector<4x578xbf16> to vector<4x512xbf16>
    %42 = vector.broadcast %29 : vector<1x512xbf16> to vector<4x512xbf16>
    %43 = arith.mulf %41, %42 : vector<4x512xbf16>
    %44 = vector.extract_strided_slice %1 {offsets = [0, 64], sizes = [4, 512], strides = [1, 1]} : vector<4x578xbf16> to vector<4x512xbf16>
    %45 = vector.broadcast %24 : vector<1x512xbf16> to vector<4x512xbf16>
    %46 = arith.mulf %44, %45 : vector<4x512xbf16>
    %47 = vector.extract_strided_slice %1 {offsets = [0, 65], sizes = [4, 512], strides = [1, 1]} : vector<4x578xbf16> to vector<4x512xbf16>
    %48 = vector.extract_strided_slice %1 {offsets = [0, 66], sizes = [4, 512], strides = [1, 1]} : vector<4x578xbf16> to vector<4x512xbf16>
    %49 = vector.broadcast %29 : vector<1x512xbf16> to vector<4x512xbf16>
    %50 = arith.mulf %48, %49 : vector<4x512xbf16>
    %51 = tpu.concatenate %32, %33, %36, %39, %40, %43, %46, %47, %50 in 0 : vector<4x512xbf16>, vector<4x512xbf16>, vector<4x512xbf16>, vector<4x512xbf16>, vector<4x512xbf16>, vector<4x512xbf16>, vector<4x512xbf16>, vector<4x512xbf16>, vector<4x512xbf16> -> vector<36x512xbf16>
    %cst = arith.constant dense<0.000000e+00> : vector<8x512xf32>
    %52 = tpu.matmul %2, %51, %cst {dimension_numbers = #tpu.dot_dimension_numbers<[1], [0], [0], [1], [0, 0, 1, 1], [], []>} : vector<8x36xbf16>, vector<36x512xbf16>, vector<8x512xf32> -> vector<8x512xf32>
    %53 = arith.truncf %52 : vector<8x512xf32> to vector<8x512xbf16>
    %c0_9 = arith.constant 0 : index
    %c0_10 = arith.constant 0 : index
    %c0_11 = arith.constant 0 : index
    %54 = vector.load %arg4[%c0_9, %c0_10, %c0_11] : memref<1x8x512xbf16, #tpu.memory_space<vmem>>, vector<1x8x512xbf16>
    %55 = vector.shape_cast %54 : vector<1x8x512xbf16> to vector<8x512xbf16>
    %56 = vector.shape_cast %53 : vector<8x512xbf16> to vector<1x8x512xbf16>
    tpu.vector_store %arg4[%c0_9, %c0_10, %c0_11], %56 {strides = array<i32>} : memref<1x8x512xbf16, #tpu.memory_space<vmem>>, vector<1x8x512xbf16>,
    %cst_12 = arith.constant dense<0.000000e+00> : vector<8xf32>
    %57 = vector.multi_reduction <add>, %52, %cst_12 [1] : vector<8x512xf32> to vector<8xf32>
    %58 = vector.shape_cast %57 : vector<8xf32> to vector<8x1xf32>
    %59 = arith.mulf %52, %52 : vector<8x512xf32>
    %cst_13 = arith.constant dense<0.000000e+00> : vector<8xf32>
    %60 = vector.multi_reduction <add>, %59, %cst_13 [1] : vector<8x512xf32> to vector<8xf32>
    %61 = vector.shape_cast %60 : vector<8xf32> to vector<8x1xf32>
    %62 = tpu.concatenate %58, %61 in 1 : vector<8x1xf32>, vector<8x1xf32> -> vector<8x2xf32>
    %c0_14 = arith.constant 0 : index
    %c0_15 = arith.constant 0 : index
    %c0_16 = arith.constant 0 : index
    %c0_17 = arith.constant 0 : index
    %63 = vector.load %arg5[%c0_14, %c0_15, %c0_16, %c0_17] : memref<1x1x8x2xf32, #tpu.memory_space<vmem>>, vector<1x1x8x2xf32>
    %64 = vector.shape_cast %63 : vector<1x1x8x2xf32> to vector<8x2xf32>
    %65 = vector.shape_cast %62 : vector<8x2xf32> to vector<1x1x8x2xf32>
    tpu.vector_store %arg5[%c0_14, %c0_15, %c0_16, %c0_17], %65 {strides = array<i32>} : memref<1x1x8x2xf32, #tpu.memory_space<vmem>>, vector<1x1x8x2xf32>,
    return
  }
  func.func @transform_0(%arg0: i32, %arg1: i32) -> (i32, i32, i32, i32) {
    %c0_i32 = arith.constant 0 : i32
    %c0_i32_0 = arith.constant 0 : i32
    %c0_i32_1 = arith.constant 0 : i32
    return %arg0, %arg1, %c0_i32, %c0_i32_0 : i32, i32, i32, i32
  }
  func.func @transform_1(%arg0: i32, %arg1: i32) -> (i32, i32) {
    %c0_i32 = arith.constant 0 : i32
    %c0_i32_0 = arith.constant 0 : i32
    %c0_i32_1 = arith.constant 0 : i32
    return %c0_i32, %c0_i32_0 : i32, i32
  }
  func.func @transform_2(%arg0: i32, %arg1: i32) -> (i32, i32, i32) {
    %c0_i32 = arith.constant 0 : i32
    %c0_i32_0 = arith.constant 0 : i32
    return %arg0, %c0_i32, %arg1 : i32, i32, i32
  }
  func.func @transform_3(%arg0: i32, %arg1: i32) -> (i32, i32, i32, i32) {
    %c0_i32 = arith.constant 0 : i32
    %c0_i32_0 = arith.constant 0 : i32
    %c0_i32_1 = arith.constant 0 : i32
    return %arg0, %arg1, %c0_i32, %c0_i32_0 : i32, i32, i32, i32
  }
}

module attributes {stable_mosaic.version = 11 : i64} {
  func.func @_act_conv_kernel(%arg0: i32, %arg1: i32, %arg2: memref<1x1x8x578xbf16, #tpu.memory_space<vmem>>, %arg3: memref<8x72xbf16, #tpu.memory_space<vmem>>, %arg4: memref<8x1xf32, #tpu.memory_space<vmem>>, %arg5: memref<8x1xf32, #tpu.memory_space<vmem>>, %arg6: memref<1x8x512xbf16, #tpu.memory_space<vmem>>, %arg7: memref<1x1x8x2xf32, #tpu.memory_space<vmem>>) attributes {dimension_semantics = [#tpu.dimension_semantics<parallel>, #tpu.dimension_semantics<parallel>], iteration_bounds = array<i64: 2, 2>, scalar_prefetch = 0 : i64, scratch_operands = 0 : i64, tpu.core_type = #tpu.core_type<tc>, window_params = [{transform_indices = @transform_0, window_bounds = array<i64: 1, 1, 8, 578>}, {pipeline_mode = #tpu.pipeline_mode<synchronous>, transform_indices = @transform_1, window_bounds = array<i64: 8, 72>}, {pipeline_mode = #tpu.pipeline_mode<synchronous>, transform_indices = @transform_2, window_bounds = array<i64: 8, 1>}, {pipeline_mode = #tpu.pipeline_mode<synchronous>, transform_indices = @transform_3, window_bounds = array<i64: 8, 1>}, {transform_indices = @transform_4, window_bounds = array<i64: 1, 8, 512>}, {transform_indices = @transform_5, window_bounds = array<i64: 1, 1, 8, 2>}]} {
    %c0 = arith.constant 0 : index
    %c0_0 = arith.constant 0 : index
    %c0_1 = arith.constant 0 : index
    %c0_2 = arith.constant 0 : index
    %0 = vector.load %arg2[%c0, %c0_0, %c0_1, %c0_2] : memref<1x1x8x578xbf16, #tpu.memory_space<vmem>>, vector<1x1x8x578xbf16>
    %1 = vector.shape_cast %0 : vector<1x1x8x578xbf16> to vector<8x578xbf16>
    %2 = arith.extf %1 : vector<8x578xbf16> to vector<8x578xf32>
    %c0_3 = arith.constant 0 : index
    %c0_4 = arith.constant 0 : index
    %3 = vector.load %arg4[%c0_3, %c0_4] : memref<8x1xf32, #tpu.memory_space<vmem>>, vector<8x1xf32>
    %4 = vector.broadcast %3 : vector<8x1xf32> to vector<8x578xf32>
    %5 = arith.mulf %2, %4 : vector<8x578xf32>
    %c0_5 = arith.constant 0 : index
    %c0_6 = arith.constant 0 : index
    %6 = vector.load %arg5[%c0_5, %c0_6] : memref<8x1xf32, #tpu.memory_space<vmem>>, vector<8x1xf32>
    %7 = vector.broadcast %6 : vector<8x1xf32> to vector<8x578xf32>
    %8 = arith.addf %5, %7 : vector<8x578xf32>
    %cst = arith.constant 0.000000e+00 : f32
    %9 = vector.broadcast %cst : f32 to vector<8x578xf32>
    %10 = arith.maximumf %8, %9 : vector<8x578xf32>
    %11 = tpu.iota {dimensions = array<i32: 1>} : vector<1x578xi32>
    %c512_i32 = arith.constant 512 : i32
    %12 = arith.muli %arg1, %c512_i32 : i32
    %13 = vector.broadcast %12 : i32 to vector<1x578xi32>
    %14 = arith.addi %11, %13 : vector<1x578xi32>
    %c33_i32 = arith.constant 33 : i32
    %15 = vector.broadcast %c33_i32 : i32 to vector<1x578xi32>
    %16 = arith.cmpi sge, %14, %15 : vector<1x578xi32>
    %c1057_i32 = arith.constant 1057 : i32
    %17 = vector.broadcast %c1057_i32 : i32 to vector<1x578xi32>
    %18 = arith.cmpi slt, %14, %17 : vector<1x578xi32>
    %19 = arith.andi %16, %18 : vector<1x578xi1>
    %20 = arith.extui %19 : vector<1x578xi1> to vector<1x578xi32>
    %21 = arith.sitofp %20 : vector<1x578xi32> to vector<1x578xf32>
    %22 = vector.broadcast %21 : vector<1x578xf32> to vector<8x578xf32>
    %23 = arith.mulf %10, %22 : vector<8x578xf32>
    %24 = arith.truncf %23 : vector<8x578xf32> to vector<8x578xbf16>
    %c0_7 = arith.constant 0 : index
    %c0_8 = arith.constant 0 : index
    %25 = vector.load %arg3[%c0_7, %c0_8] : memref<8x72xbf16, #tpu.memory_space<vmem>>, vector<8x72xbf16>
    %26 = tpu.iota {dimensions = array<i32: 1>} : vector<1x512xi32>
    %c32_i32 = arith.constant 32 : i32
    %c0_i32 = arith.constant 0 : i32
    %27 = arith.cmpi eq, %c32_i32, %c0_i32 : i32
    %c1_i32 = arith.constant 1 : i32
    %28 = arith.select %27, %c1_i32, %c32_i32 : i32
    %29 = vector.broadcast %28 : i32 to vector<1x512xi32>
    %30 = arith.remsi %26, %29 : vector<1x512xi32>
    %c0_i32_9 = arith.constant 0 : i32
    %31 = vector.broadcast %c0_i32_9 : i32 to vector<1x512xi32>
    %32 = arith.cmpi ne, %30, %31 : vector<1x512xi32>
    %c0_i32_10 = arith.constant 0 : i32
    %33 = vector.broadcast %c0_i32_10 : i32 to vector<1x512xi32>
    %34 = arith.cmpi slt, %30, %33 : vector<1x512xi32>
    %c0_i32_11 = arith.constant 0 : i32
    %35 = arith.cmpi slt, %28, %c0_i32_11 : i32
    %36 = vector.broadcast %35 : i1 to vector<1x512xi1>
    %37 = vector.broadcast %36 : vector<1x512xi1> to vector<1x512xi1>
    %38 = arith.xori %34, %37 : vector<1x512xi1>
    %39 = arith.andi %38, %32 : vector<1x512xi1>
    %40 = vector.broadcast %28 : i32 to vector<1x512xi32>
    %41 = arith.addi %30, %40 : vector<1x512xi32>
    %42 = arith.select %39, %41, %30 : vector<1x512xi1>, vector<1x512xi32>
    %c0_i32_12 = arith.constant 0 : i32
    %43 = vector.broadcast %c0_i32_12 : i32 to vector<1x512xi32>
    %44 = arith.cmpi ne, %42, %43 : vector<1x512xi32>
    %45 = arith.extui %44 : vector<1x512xi1> to vector<1x512xi32>
    %46 = arith.sitofp %45 : vector<1x512xi32> to vector<1x512xf32>
    %47 = arith.truncf %46 : vector<1x512xf32> to vector<1x512xbf16>
    %c31_i32 = arith.constant 31 : i32
    %48 = vector.broadcast %c31_i32 : i32 to vector<1x512xi32>
    %49 = arith.cmpi ne, %42, %48 : vector<1x512xi32>
    %50 = arith.extui %49 : vector<1x512xi1> to vector<1x512xi32>
    %51 = arith.sitofp %50 : vector<1x512xi32> to vector<1x512xf32>
    %52 = arith.truncf %51 : vector<1x512xf32> to vector<1x512xbf16>
    %53 = vector.extract_strided_slice %24 {offsets = [0, 0], sizes = [8, 512], strides = [1, 1]} : vector<8x578xbf16> to vector<8x512xbf16>
    %54 = vector.broadcast %47 : vector<1x512xbf16> to vector<8x512xbf16>
    %55 = arith.mulf %53, %54 : vector<8x512xbf16>
    %56 = vector.extract_strided_slice %24 {offsets = [0, 1], sizes = [8, 512], strides = [1, 1]} : vector<8x578xbf16> to vector<8x512xbf16>
    %57 = vector.extract_strided_slice %24 {offsets = [0, 2], sizes = [8, 512], strides = [1, 1]} : vector<8x578xbf16> to vector<8x512xbf16>
    %58 = vector.broadcast %52 : vector<1x512xbf16> to vector<8x512xbf16>
    %59 = arith.mulf %57, %58 : vector<8x512xbf16>
    %60 = vector.extract_strided_slice %24 {offsets = [0, 32], sizes = [8, 512], strides = [1, 1]} : vector<8x578xbf16> to vector<8x512xbf16>
    %61 = vector.broadcast %47 : vector<1x512xbf16> to vector<8x512xbf16>
    %62 = arith.mulf %60, %61 : vector<8x512xbf16>
    %63 = vector.extract_strided_slice %24 {offsets = [0, 33], sizes = [8, 512], strides = [1, 1]} : vector<8x578xbf16> to vector<8x512xbf16>
    %64 = vector.extract_strided_slice %24 {offsets = [0, 34], sizes = [8, 512], strides = [1, 1]} : vector<8x578xbf16> to vector<8x512xbf16>
    %65 = vector.broadcast %52 : vector<1x512xbf16> to vector<8x512xbf16>
    %66 = arith.mulf %64, %65 : vector<8x512xbf16>
    %67 = vector.extract_strided_slice %24 {offsets = [0, 64], sizes = [8, 512], strides = [1, 1]} : vector<8x578xbf16> to vector<8x512xbf16>
    %68 = vector.broadcast %47 : vector<1x512xbf16> to vector<8x512xbf16>
    %69 = arith.mulf %67, %68 : vector<8x512xbf16>
    %70 = vector.extract_strided_slice %24 {offsets = [0, 65], sizes = [8, 512], strides = [1, 1]} : vector<8x578xbf16> to vector<8x512xbf16>
    %71 = vector.extract_strided_slice %24 {offsets = [0, 66], sizes = [8, 512], strides = [1, 1]} : vector<8x578xbf16> to vector<8x512xbf16>
    %72 = vector.broadcast %52 : vector<1x512xbf16> to vector<8x512xbf16>
    %73 = arith.mulf %71, %72 : vector<8x512xbf16>
    %74 = tpu.concatenate %55, %56, %59, %62, %63, %66, %69, %70, %73 in 0 : vector<8x512xbf16>, vector<8x512xbf16>, vector<8x512xbf16>, vector<8x512xbf16>, vector<8x512xbf16>, vector<8x512xbf16>, vector<8x512xbf16>, vector<8x512xbf16>, vector<8x512xbf16> -> vector<72x512xbf16>
    %cst_13 = arith.constant dense<0.000000e+00> : vector<8x512xf32>
    %75 = tpu.matmul %25, %74, %cst_13 {dimension_numbers = #tpu.dot_dimension_numbers<[1], [0], [0], [1], [0, 0, 1, 1], [], []>} : vector<8x72xbf16>, vector<72x512xbf16>, vector<8x512xf32> -> vector<8x512xf32>
    %76 = arith.truncf %75 : vector<8x512xf32> to vector<8x512xbf16>
    %c0_14 = arith.constant 0 : index
    %c0_15 = arith.constant 0 : index
    %c0_16 = arith.constant 0 : index
    %77 = vector.load %arg6[%c0_14, %c0_15, %c0_16] : memref<1x8x512xbf16, #tpu.memory_space<vmem>>, vector<1x8x512xbf16>
    %78 = vector.shape_cast %77 : vector<1x8x512xbf16> to vector<8x512xbf16>
    %79 = vector.shape_cast %76 : vector<8x512xbf16> to vector<1x8x512xbf16>
    tpu.vector_store %arg6[%c0_14, %c0_15, %c0_16], %79 {strides = array<i32>} : memref<1x8x512xbf16, #tpu.memory_space<vmem>>, vector<1x8x512xbf16>,
    %cst_17 = arith.constant dense<0.000000e+00> : vector<8xf32>
    %80 = vector.multi_reduction <add>, %75, %cst_17 [1] : vector<8x512xf32> to vector<8xf32>
    %81 = vector.shape_cast %80 : vector<8xf32> to vector<8x1xf32>
    %82 = arith.mulf %75, %75 : vector<8x512xf32>
    %cst_18 = arith.constant dense<0.000000e+00> : vector<8xf32>
    %83 = vector.multi_reduction <add>, %82, %cst_18 [1] : vector<8x512xf32> to vector<8xf32>
    %84 = vector.shape_cast %83 : vector<8xf32> to vector<8x1xf32>
    %85 = tpu.concatenate %81, %84 in 1 : vector<8x1xf32>, vector<8x1xf32> -> vector<8x2xf32>
    %c0_19 = arith.constant 0 : index
    %c0_20 = arith.constant 0 : index
    %c0_21 = arith.constant 0 : index
    %c0_22 = arith.constant 0 : index
    %86 = vector.load %arg7[%c0_19, %c0_20, %c0_21, %c0_22] : memref<1x1x8x2xf32, #tpu.memory_space<vmem>>, vector<1x1x8x2xf32>
    %87 = vector.shape_cast %86 : vector<1x1x8x2xf32> to vector<8x2xf32>
    %88 = vector.shape_cast %85 : vector<8x2xf32> to vector<1x1x8x2xf32>
    tpu.vector_store %arg7[%c0_19, %c0_20, %c0_21, %c0_22], %88 {strides = array<i32>} : memref<1x1x8x2xf32, #tpu.memory_space<vmem>>, vector<1x1x8x2xf32>,
    return
  }
  func.func @transform_0(%arg0: i32, %arg1: i32) -> (i32, i32, i32, i32) {
    %c0_i32 = arith.constant 0 : i32
    %c0_i32_0 = arith.constant 0 : i32
    %c0_i32_1 = arith.constant 0 : i32
    return %arg0, %arg1, %c0_i32, %c0_i32_0 : i32, i32, i32, i32
  }
  func.func @transform_1(%arg0: i32, %arg1: i32) -> (i32, i32) {
    %c0_i32 = arith.constant 0 : i32
    %c0_i32_0 = arith.constant 0 : i32
    %c0_i32_1 = arith.constant 0 : i32
    return %c0_i32, %c0_i32_0 : i32, i32
  }
  func.func @transform_2(%arg0: i32, %arg1: i32) -> (i32, i32) {
    %c0_i32 = arith.constant 0 : i32
    %c0_i32_0 = arith.constant 0 : i32
    %c0_i32_1 = arith.constant 0 : i32
    return %c0_i32, %c0_i32_0 : i32, i32
  }
  func.func @transform_3(%arg0: i32, %arg1: i32) -> (i32, i32) {
    %c0_i32 = arith.constant 0 : i32
    %c0_i32_0 = arith.constant 0 : i32
    %c0_i32_1 = arith.constant 0 : i32
    return %c0_i32, %c0_i32_0 : i32, i32
  }
  func.func @transform_4(%arg0: i32, %arg1: i32) -> (i32, i32, i32) {
    %c0_i32 = arith.constant 0 : i32
    %c0_i32_0 = arith.constant 0 : i32
    return %arg0, %c0_i32, %arg1 : i32, i32, i32
  }
  func.func @transform_5(%arg0: i32, %arg1: i32) -> (i32, i32, i32, i32) {
    %c0_i32 = arith.constant 0 : i32
    %c0_i32_0 = arith.constant 0 : i32
    %c0_i32_1 = arith.constant 0 : i32
    return %arg0, %arg1, %c0_i32, %c0_i32_0 : i32, i32, i32, i32
  }
}

module attributes {stable_mosaic.version = 11 : i64} {
  func.func @_bn_relu_kernel(%arg0: i32, %arg1: i32, %arg2: memref<1x8x512xbf16, #tpu.memory_space<vmem>>, %arg3: memref<8x1xf32, #tpu.memory_space<vmem>>, %arg4: memref<8x1xf32, #tpu.memory_space<vmem>>, %arg5: memref<1x8x512xf32, #tpu.memory_space<vmem>>) attributes {dimension_semantics = [#tpu.dimension_semantics<parallel>, #tpu.dimension_semantics<parallel>], iteration_bounds = array<i64: 2, 2>, scalar_prefetch = 0 : i64, scratch_operands = 0 : i64, tpu.core_type = #tpu.core_type<tc>, window_params = [{transform_indices = @transform_0, window_bounds = array<i64: 1, 8, 512>}, {pipeline_mode = #tpu.pipeline_mode<synchronous>, transform_indices = @transform_1, window_bounds = array<i64: 8, 1>}, {pipeline_mode = #tpu.pipeline_mode<synchronous>, transform_indices = @transform_2, window_bounds = array<i64: 8, 1>}, {transform_indices = @transform_3, window_bounds = array<i64: 1, 8, 512>}]} {
    %c0 = arith.constant 0 : index
    %c0_0 = arith.constant 0 : index
    %c0_1 = arith.constant 0 : index
    %0 = vector.load %arg2[%c0, %c0_0, %c0_1] : memref<1x8x512xbf16, #tpu.memory_space<vmem>>, vector<1x8x512xbf16>
    %1 = vector.shape_cast %0 : vector<1x8x512xbf16> to vector<8x512xbf16>
    %2 = arith.extf %1 : vector<8x512xbf16> to vector<8x512xf32>
    %c0_2 = arith.constant 0 : index
    %c0_3 = arith.constant 0 : index
    %3 = vector.load %arg3[%c0_2, %c0_3] : memref<8x1xf32, #tpu.memory_space<vmem>>, vector<8x1xf32>
    %4 = vector.broadcast %3 : vector<8x1xf32> to vector<8x512xf32>
    %5 = arith.mulf %2, %4 : vector<8x512xf32>
    %c0_4 = arith.constant 0 : index
    %c0_5 = arith.constant 0 : index
    %6 = vector.load %arg4[%c0_4, %c0_5] : memref<8x1xf32, #tpu.memory_space<vmem>>, vector<8x1xf32>
    %7 = vector.broadcast %6 : vector<8x1xf32> to vector<8x512xf32>
    %8 = arith.addf %5, %7 : vector<8x512xf32>
    %cst = arith.constant 0.000000e+00 : f32
    %9 = vector.broadcast %cst : f32 to vector<8x512xf32>
    %10 = arith.maximumf %8, %9 : vector<8x512xf32>
    %c0_6 = arith.constant 0 : index
    %c0_7 = arith.constant 0 : index
    %c0_8 = arith.constant 0 : index
    %11 = vector.load %arg5[%c0_6, %c0_7, %c0_8] : memref<1x8x512xf32, #tpu.memory_space<vmem>>, vector<1x8x512xf32>
    %12 = vector.shape_cast %11 : vector<1x8x512xf32> to vector<8x512xf32>
    %13 = vector.shape_cast %10 : vector<8x512xf32> to vector<1x8x512xf32>
    tpu.vector_store %arg5[%c0_6, %c0_7, %c0_8], %13 {strides = array<i32>} : memref<1x8x512xf32, #tpu.memory_space<vmem>>, vector<1x8x512xf32>,
    return
  }
  func.func @transform_0(%arg0: i32, %arg1: i32) -> (i32, i32, i32) {
    %c0_i32 = arith.constant 0 : i32
    %c0_i32_0 = arith.constant 0 : i32
    return %arg0, %c0_i32, %arg1 : i32, i32, i32
  }
  func.func @transform_1(%arg0: i32, %arg1: i32) -> (i32, i32) {
    %c0_i32 = arith.constant 0 : i32
    %c0_i32_0 = arith.constant 0 : i32
    %c0_i32_1 = arith.constant 0 : i32
    return %c0_i32, %c0_i32_0 : i32, i32
  }
  func.func @transform_2(%arg0: i32, %arg1: i32) -> (i32, i32) {
    %c0_i32 = arith.constant 0 : i32
    %c0_i32_0 = arith.constant 0 : i32
    %c0_i32_1 = arith.constant 0 : i32
    return %c0_i32, %c0_i32_0 : i32, i32
  }
  func.func @transform_3(%arg0: i32, %arg1: i32) -> (i32, i32, i32) {
    %c0_i32 = arith.constant 0 : i32
    %c0_i32_0 = arith.constant 0 : i32
    return %arg0, %c0_i32, %arg1 : i32, i32, i32
  }
}

</mosaic_0001>

<llo_original>
// kernel: upsample_conv_forward.3
$region0: #{upsample_conv_forward.3}
  #allocation0 [shape = 'u32[]', space=smem, size = 0x4, offset = 0x4, fixed_abs, tag = 'smem constant byte address 0x4 - core index']
  #allocation1 [shape = 'u32[144,128]{1,0:T(1,128)}', space=vmem, size = 0x12000, scoped, tag = 'internal scratch']
  %s0 = inlined_call_operand.vmem [shape: bf16[2,2,4,578], index: 0, kind: input, shape index: {}]
  %s1 = inlined_call_operand.vmem [shape: bf16[8,36], index: 1, kind: input, shape index: {}]
  %s2 = inlined_call_operand.vmem [shape: bf16[2,8,1024], index: 2, kind: output, shape index: {0}]
  %s3 = inlined_call_operand.vmem [shape: f32[2,2,8,2], index: 3, kind: output, shape index: {1}]
  %4 = xla_tuple %s2, %s3
  %s5 = sld [smem:[#allocation0]]
  $region49: #{upsample_conv_forward.3} parent=0
    _
  %s7 = ssub.s32 1, %s5
  %s8 = scalar_select 0, %s7, %s5
  loop: start=0, step=1, limit=6
  $region2: #{upsample_conv_forward.3} parent=0 // loop_pre_header
    _
  $region3: #{upsample_conv_forward.3} parent=0 // loop_header
    %s10 = sphi 0, %s14
    %p11 = scmp.ge.s32.totalorder %s10, 6
    %s17 = sphi 0, %s29
    %s18 = sphi 0, %s25
    %s19 = sphi 0, %s17
    %s20 = sphi 0, %s18
    %s21 = sphi 0, %s19
    %s22 = sphi 0, %s20
    %s34 = sphi 0, %s36
    %s37 = sphi 0, %s34
    %s38 = sphi 0, %s37
    %s54 = sphi 0, %s38
    %s58 = sphi 0, %s58
    %s60 = sphi 0, %s58
    %s61 = sphi 0, %s60
    %s75 = sphi 0, %s61
    %s83 = sphi 0, %s85
    %s86 = sphi 0, %s83
    %s87 = sphi 0, %s86
    %s103 = sphi 0, %s87
    %s111 = sphi 0, %s113
    %s114 = sphi 0, %s111
    %s115 = sphi 0, %s114
    %s131 = sphi 0, %s115
  $region4: #{upsample_conv_forward.3} parent=0 // loop_header_branch
    %13 = sbr.rel (%p11) target = $region8
  $region5: #{upsample_conv_forward.3} parent=0 // loop_body
    %s15 = ssub.s32 %s10, 1
    %s16 = ssub.s32 %s10, 2
    %s23 = sadd.s32 1, %s18
    %p24 = scmp.ge.s32.totalorder %s23, 2
    %s25 = scalar_select %p24, 0, %s23
    %s26 = sadd.s32 1, %s17
    %s27 = scalar_select %p24, %s26, %s17
    %p28 = scmp.ge.s32.totalorder %s27, 2
    %s29 = scalar_select %p28, 0, %s27
    %s30 = ssub.s32 %s17, %s29
    %s31 = ssub.s32 %s18, %s25
    %s32 = sor.u32 %s30, %s31
    %p33 = scmp.eq.s32.totalorder %s32, 0
    %s35 = sadd.s32 %s34, 1
    %s36 = scalar_select %p33, %s34, %s35
    %p39 = pneg %p33
    %p40 = scmp.eq.s32.totalorder %s10, 3
    %p41 = por %p39, %p40
    %p42 = scmp.ne.s32.totalorder %s34, %s37
    %p43 = scmp.eq.s32.totalorder %s10, 0
    %p44 = por %p42, %p43
    %p45 = scmp.ne.s32.totalorder %s34, %s37
    %p46 = scmp.eq.s32.totalorder %s15, 3
    %p47 = por %p45, %p46
    %p48 = scmp.ne.s32.totalorder %s37, %s38
    %p49 = scmp.eq.s32.totalorder %s15, 0
    %p50 = por %p48, %p49
    %p51 = scmp.ne.s32.totalorder %s37, %s38
    %p52 = scmp.eq.s32.totalorder %s16, 3
    %p53 = por %p51, %p52
    %p55 = scmp.ne.s32.totalorder %s38, %s54
    %p56 = scmp.eq.s32.totalorder %s16, 0
    %p57 = por %p55, %p56
    %s59 = sadd.s32 %s58, 1
    %p62 = scmp.eq.s32.totalorder %s10, 3
    %p63 = scmp.ne.s32.totalorder %s58, %s60
    %p64 = scmp.eq.s32.totalorder %s10, 0
    %p65 = por %p63, %p64
    %p66 = scmp.ne.s32.totalorder %s58, %s60
    %p67 = scmp.eq.s32.totalorder %s15, 3
    %p68 = por %p66, %p67
    %p69 = scmp.ne.s32.totalorder %s60, %s61
    %p70 = scmp.eq.s32.totalorder %s15, 0
    %p71 = por %p69, %p70
    %p72 = scmp.ne.s32.totalorder %s60, %s61
    %p73 = scmp.eq.s32.totalorder %s16, 3
    %p74 = por %p72, %p73
    %p76 = scmp.ne.s32.totalorder %s61, %s75
    %p77 = scmp.eq.s32.totalorder %s16, 0
    %p78 = por %p76, %p77
    %s79 = ssub.s32 %s17, %s29
    %s80 = ssub.s32 %s18, %s25
    %s81 = sor.u32 %s79, %s80
    %p82 = scmp.eq.s32.totalorder %s81, 0
    %s84 = sadd.s32 %s83, 1
    %s85 = scalar_select %p82, %s83, %s84
    %p88 = pneg %p82
    %p89 = scmp.eq.s32.totalorder %s10, 3
    %p90 = por %p88, %p89
    %p91 = scmp.ne.s32.totalorder %s83, %s86
    %p92 = scmp.eq.s32.totalorder %s10, 0
    %p93 = por %p91, %p92
    %p94 = scmp.ne.s32.totalorder %s83, %s86
    %p95 = scmp.eq.s32.totalorder %s15, 3
    %p96 = por %p94, %p95
    %p97 = scmp.ne.s32.totalorder %s86, %s87
    %p98 = scmp.eq.s32.totalorder %s15, 0
    %p99 = por %p97, %p98
    %p100 = scmp.ne.s32.totalorder %s86, %s87
    %p101 = scmp.eq.s32.totalorder %s16, 3
    %p102 = por %p100, %p101
    %p104 = scmp.ne.s32.totalorder %s87, %s103
    %p105 = scmp.eq.s32.totalorder %s16, 0
    %p106 = por %p104, %p105
    %s107 = ssub.s32 %s17, %s29
    %s108 = ssub.s32 %s18, %s25
    %s109 = sor.u32 %s107, %s108
    %p110 = scmp.eq.s32.totalorder %s109, 0
    %s112 = sadd.s32 %s111, 1
    %s113 = scalar_select %p110, %s111, %s112
    %p116 = pneg %p110
    %p117 = scmp.eq.s32.totalorder %s10, 3
    %p118 = por %p116, %p117
    %p119 = scmp.ne.s32.totalorder %s111, %s114
    %p120 = scmp.eq.s32.totalorder %s10, 0
    %p121 = por %p119, %p120
    %p122 = scmp.ne.s32.totalorder %s111, %s114
    %p123 = scmp.eq.s32.totalorder %s15, 3
    %p124 = por %p122, %p123
    %p125 = scmp.ne.s32.totalorder %s114, %s115
    %p126 = scmp.eq.s32.totalorder %s15, 0
    %p127 = por %p125, %p126
    %p128 = scmp.ne.s32.totalorder %s114, %s115
    %p129 = scmp.eq.s32.totalorder %s16, 3
    %p130 = por %p128, %p129
    %p132 = scmp.ne.s32.totalorder %s115, %s131
    %p133 = scmp.eq.s32.totalorder %s16, 0
    %p134 = por %p132, %p133
    %p135 = scmp.le.s32.totalorder 1, %s10
    %p136 = scmp.lt.s32.totalorder %s10, 5
    %p137 = pnand %p135, %p136
    %p138 = pneg %p137
    // Predicated region
    $region9: #{upsample_conv_forward.3} parent=5 // pred_check
      _
    $region10: #{upsample_conv_forward.3} parent=5 // pred_check_branch
      %140 = sbr.rel (%p137) target = $region12
    $region11: #{upsample_conv_forward.3} parent=5 // pred_region
      %s141 = ssub.s32 %s10, 1
      // Predicated region
      $region13: #{upsample_conv_forward.3} parent=11 // pred_check
        %p142 = pneg %p71
      $region14: #{upsample_conv_forward.3} parent=11 // pred_check_branch
        %144 = sbr.rel (%p142) target = $region16
      $region15: #{upsample_conv_forward.3} parent=11 // pred_region
        _
      $region16: #{upsample_conv_forward.3} parent=11 // pred_fallthru
        _
    $region12: #{upsample_conv_forward.3} parent=5 // pred_fallthru
      _
    %p145 = scmp.lt.s32.totalorder %s10, 4
    // Predicated region
    $region17: #{upsample_conv_forward.3} parent=5 // pred_check
      %p146 = pneg %p145
    $region18: #{upsample_conv_forward.3} parent=5 // pred_check_branch
      %148 = sbr.rel (%p146) target = $region20
    $region19: #{upsample_conv_forward.3} parent=5 // pred_region
      // Predicated region
      $region21: #{upsample_conv_forward.3} parent=19 // pred_check
        %p149 = pneg %p44
      $region22: #{upsample_conv_forward.3} parent=19 // pred_check_branch
        %151 = sbr.rel (%p149) target = $region24
      $region23: #{upsample_conv_forward.3} parent=19 // pred_region
        %p152 = scmp.lt.s32.totalorder %s17, 1
        %s153 = scalar_select %p152, %s17, 1
        %p154 = scmp.lt.s32.totalorder %s18, 1
        %s155 = scalar_select %p154, %s18, 1
        %s156 = smul.addr %s155, 5
        %s157 = smul.addr %s153, 10
        %s158 = sadd.s32 %s156, %s157
        %s159 = smul.addr %s158, 2
        %s160 = scalar_lea.vmem %s0, %s159
      $region24: #{upsample_conv_forward.3} parent=19 // pred_fallthru
        _
    $region20: #{upsample_conv_forward.3} parent=5 // pred_fallthru
      _
    %p161 = scmp.le.s32.totalorder 1, %s10
    %p162 = scmp.lt.s32.totalorder %s10, 5
    %p163 = pnand %p161, %p162
    %p164 = pneg %p163
    // Predicated region
    $region25: #{upsample_conv_forward.3} parent=5 // pred_check
      _
    $region26: #{upsample_conv_forward.3} parent=5 // pred_check_branch
      %166 = sbr.rel (%p163) target = $region28
    $region27: #{upsample_conv_forward.3} parent=5 // pred_region
      %s167 = ssub.s32 %s10, 1
      %p168 = scmp.lt.s32.totalorder %s19, 1
      %s169 = scalar_select %p168, %s19, 1
      %p170 = scmp.lt.s32.totalorder %s20, 1
      %s171 = scalar_select %p170, %s20, 1
      %s172 = smul.addr %s171, 5
      %s173 = smul.addr %s169, 10
      %s174 = sadd.s32 %s172, %s173
      %s175 = smul.addr %s174, 2
      %s176 = scalar_lea.vmem %s0, %s175
      %p177 = pneg %p50
      %p178 = pneg %p47
      %p179 = pneg %p71
      %p180 = pneg %p68
      %p181 = pneg %p99
      %p182 = pneg %p96
      %s183 = smul.u32 4, %s20
      %p184 = scmp.lt.s32.totalorder %s19, 1
      %s185 = scalar_select %p184, %s19, 1
      %p186 = scmp.lt.s32.totalorder %s183, 7
      %s187 = scalar_select %p186, %s183, 7
      %s188 = smul.addr %s185, 8
      %s189 = sadd.s32 %s187, %s188
      %s190 = smul.addr %s189, 4
      %s191 = scalar_lea.vmem %s2, %s190
      %p192 = pneg %p127
      %p193 = pneg %p124
      %p194 = scmp.lt.s32.totalorder %s19, 1
      %s195 = scalar_select %p194, %s19, 1
      %p196 = scmp.lt.s32.totalorder %s20, 1
      %s197 = scalar_select %p196, %s20, 1
      %s198 = smul.addr %s195, 2
      %s199 = sadd.s32 %s197, %s198
      %s200 = smul.addr %s199, 8
      %s201 = scalar_lea.vmem %s3, %s200
      %p202 = scmp.lt.s32.totalorder %s19, 1
      %s203 = scalar_select %p202, %s19, 1
      %p204 = scmp.lt.s32.totalorder %s20, 1
      %s205 = scalar_select %p204, %s20, 1
      %s206 = smul.addr %s205, 5
      %s207 = smul.addr %s203, 10
      %s208 = sadd.s32 %s206, %s207
      %s209 = smul.addr %s208, 2
      %s210 = scalar_lea.vmem %s0, %s209
      %s211 = smul.u32 4, %s20
      %p212 = scmp.lt.s32.totalorder %s19, 1
      %s213 = scalar_select %p212, %s19, 1
      %p214 = scmp.lt.s32.totalorder %s211, 7
      %s215 = scalar_select %p214, %s211, 7
      %s216 = smul.addr %s213, 8
      %s217 = sadd.s32 %s215, %s216
      %s218 = smul.addr %s217, 4
      %s219 = scalar_lea.vmem %s2, %s218
      %s220 = smul.u32 4, %s20
      %p221 = scmp.lt.s32.totalorder %s19, 1
      %s222 = scalar_select %p221, %s19, 1
      %p223 = scmp.lt.s32.totalorder %s20, 1
      %s224 = scalar_select %p223, %s20, 1
      %s225 = smul.addr %s222, 2
      %s226 = sadd.s32 %s224, %s225
      %s227 = smul.addr %s226, 8
      %s228 = scalar_lea.vmem %s3, %s227
      %v230 = vld [vmem:[%s210] sm:$0xff]
      %v231 = vld [vmem:[%s210 + $0x8] sm:$0x3]
      %v232 = vld [vmem:[%s1] sm:$0xf]
      %v233 = vlaneseq
      %v234 = vand.u32 %v233, 127
      %v235 = vadd.s32 %v234, 128
      %v236 = vadd.s32 %v234, 256
      %v237 = vadd.s32 %v234, 384
      %vm238 = vcmp.lt.s32.totalorder %v234, 0
      %v239 = vsub.s32 0, %v234
      %v240 = vsel %vm238, %v239, %v234
      %v241 = vshrl.u32 %v240, 5
      %v242 = vand.u32 %v240, 31
      %v243 = vsub.s32 0, %v242
      %v244 = vsel %vm238, %v243, %v242
      %vm245 = vcmp.lt.s32.totalorder %v235, 0
      %v246 = vsub.s32 0, %v235
      %v247 = vsel %vm245, %v246, %v235
      %v248 = vshrl.u32 %v247, 5
      %v249 = vand.u32 %v247, 31
      %v250 = vsub.s32 0, %v249
      %v251 = vsel %vm245, %v250, %v249
      %vm252 = vcmp.lt.s32.totalorder %v236, 0
      %v253 = vsub.s32 0, %v236
      %v254 = vsel %vm252, %v253, %v236
      %v255 = vshrl.u32 %v254, 5
      %v256 = vand.u32 %v254, 31
      %v257 = vsub.s32 0, %v256
      %v258 = vsel %vm252, %v257, %v256
      %vm259 = vcmp.lt.s32.totalorder %v237, 0
      %v260 = vsub.s32 0, %v237
      %v261 = vsel %vm259, %v260, %v237
      %v262 = vshrl.u32 %v261, 5
      %v263 = vand.u32 %v261, 31
      %v264 = vsub.s32 0, %v263
      %v265 = vsel %vm259, %v264, %v263
      %vm266 = vcmp.ne.s32.totalorder %v244, 0
      %vm267 = vcmp.ne.s32.totalorder %v251, 0
      %vm268 = vcmp.ne.s32.totalorder %v258, 0
      %vm269 = vcmp.ne.s32.totalorder %v265, 0
      %vm270 = vcmp.lt.s32.totalorder %v244, 0
      %vm271 = vcmp.lt.s32.totalorder %v251, 0
      %vm272 = vcmp.lt.s32.totalorder %v258, 0
      %vm273 = vcmp.lt.s32.totalorder %v265, 0
      %vm274 = vmand %vm270, %vm266
      %vm275 = vmand %vm271, %vm267
      %vm276 = vmand %vm272, %vm268
      %vm277 = vmand %vm273, %vm269
      %v278 = vadd.s32 %v244, 32
      %v279 = vadd.s32 %v251, 32
      %v280 = vadd.s32 %v258, 32
      %v281 = vadd.s32 %v265, 32
      %v282 = vsel %vm274, %v278, %v244
      %v283 = vsel %vm275, %v279, %v251
      %v284 = vsel %vm276, %v280, %v258
      %v285 = vsel %vm277, %v281, %v265
      %vm286 = vcmp.ne.s32.totalorder %v282, 0
      %vm287 = vcmp.ne.s32.totalorder %v283, 0
      %vm288 = vcmp.ne.s32.totalorder %v284, 0
      %vm289 = vcmp.ne.s32.totalorder %v285, 0
      %v290 = vsel %vm286, 1, 0
      %v291 = vsel %vm287, 1, 0
      %v292 = vsel %vm288, 1, 0
      %v293 = vsel %vm289, 1, 0
      %v294 = vcvt.s32.f32 %v290
      %v295 = vcvt.s32.f32 %v291
      %v296 = vcvt.s32.f32 %v292
      %v297 = vcvt.s32.f32 %v293
      %v298 = vpack.c.bf16 %v294, %v294
      %v299 = vpack.c.bf16 %v295, %v295
      %v300 = vpack.c.bf16 %v296, %v296
      %v301 = vpack.c.bf16 %v297, %v297
      %vm302 = vcmp.ne.s32.totalorder %v282, 31
      %vm303 = vcmp.ne.s32.totalorder %v283, 31
      %vm304 = vcmp.ne.s32.totalorder %v284, 31
      %vm305 = vcmp.ne.s32.totalorder %v285, 31
      %v306 = vsel %vm302, 1, 0
      %v307 = vsel %vm303, 1, 0
      %v308 = vsel %vm304, 1, 0
      %v309 = vsel %vm305, 1, 0
      %v310 = vcvt.s32.f32 %v306
      %v311 = vcvt.s32.f32 %v307
      %v312 = vcvt.s32.f32 %v308
      %v313 = vcvt.s32.f32 %v309
      %v314 = vpack.c.bf16 %v310, %v310
      %v315 = vpack.c.bf16 %v311, %v311
      %v316 = vpack.c.bf16 %v312, %v312
      %v317 = vpack.c.bf16 %v313, %v313
      %v322 = vcombine.low %v298, %v299
      %v323 = vcombine.low %v300, %v301
      %v325 = vunpack.c.l.s4 1983009808
      %v326 = vunpack.c.0.s8 %v325
      %v327 = vlaneseq
      %v328 = vshrl.u32 %v327, 7
      %v329 = vsub.s32 %v326, %v328
      %v330 = vrot.slane %v322, %v329
      %v332 = vunpack.c.l.s4 1983009808
      %v333 = vunpack.c.0.s8 %v332
      %v334 = vlaneseq
      %v335 = vshrl.u32 %v334, 7
      %v336 = vsub.s32 %v333, %v335
      %v337 = vrot.slane %v323, %v336
      %v338 = vcombine.low %v330, %v337
      %v340 = vmul.bf16 %v230, %v338
      %v345 = vcombine.low %v314, %v315
      %v346 = vcombine.low %v316, %v317
      %v348 = vunpack.c.l.s4 1983009808
      %v349 = vunpack.c.0.s8 %v348
      %v350 = vlaneseq
      %v351 = vshrl.u32 %v350, 7
      %v352 = vsub.s32 %v349, %v351
      %v353 = vrot.slane %v345, %v352
      %v355 = vunpack.c.l.s4 1983009808
      %v356 = vunpack.c.0.s8 %v355
      %v357 = vlaneseq
      %v358 = vshrl.u32 %v357, 7
      %v359 = vsub.s32 %v356, %v358
      %v360 = vrot.slane %v346, %v359
      %v361 = vcombine.low %v353, %v360
      %362 = vrot.lane.b32.xlu0 %v361, 2
      %v363 = vpop.permute.xlu0 %362
      %v364 = vrot.slane %v363, 6
      %vm365 = vcmask 15360
      %v366 = vsel %vm365, %v364, %v363
      %v369 = vmul.bf16 %v230, %v366
      %v370 = vmul.bf16 %v231, %v364
      %371 = vrot.lane.b32.xlu0 %v338, 32
      %v372 = vpop.permute.xlu0 %371
      %v373 = vrot.slane %v372, 6
      %vm374 = vcmask 261120
      %v375 = vsel %vm374, %v373, %v372
      %v378 = vmul.bf16 %v230, %v375
      %v379 = vmul.bf16 %v231, %v373
      %380 = vrot.lane.b32.xlu0 %v361, 34
      %v381 = vpop.permute.xlu0 %380
      %v382 = vrot.slane %v381, 6
      %vm383 = vcmask 277504
      %v384 = vsel %vm383, %v382, %v381
      %v387 = vmul.bf16 %v230, %v384
      %v388 = vmul.bf16 %v231, %v382
      %389 = vrot.lane.b32.xlu0 %v338, 64
      %v390 = vpop.permute.xlu0 %389
      %v391 = vrot.slane %v390, 6
      %vm392 = vcmask 523264
      %v393 = vsel %vm392, %v391, %v390
      %v396 = vmul.bf16 %v230, %v393
      %v397 = vmul.bf16 %v231, %v391
      %398 = vrot.lane.b32.xlu0 %v361, 66
      %v399 = vpop.permute.xlu0 %398
      %v400 = vrot.slane %v399, 6
      %vm401 = vcmask 539648
      %v402 = vsel %vm401, %v400, %v399
      %v405 = vmul.bf16 %v230, %v402
      %v406 = vmul.bf16 %v231, %v400
      %v408 = vcombine.high %v340, %v340
      %v410 = vunpack.c.l.s4 1983009808
      %v411 = vunpack.c.0.s8 %v410
      %v412 = vlaneseq
      %v413 = vshrl.u32 %v412, 7
      %v414 = vsub.s32 %v411, %v413
      %v415 = vrot.slane %v340, %v414
      %v417 = vunpack.c.l.s4 1983009808
      %v418 = vunpack.c.0.s8 %v417
      %v419 = vlaneseq
      %v420 = vshrl.u32 %v419, 7
      %v421 = vsub.s32 %v418, %v420
      %v422 = vrot.slane %v408, %v421
      %v423 = vcombine.high %v415, %v415
      %v424 = vcombine.high %v422, %v422
      %v427 = vcombine.low %v230, %v230
      %v429 = vunpack.c.l.s4 1983009808
      %v430 = vunpack.c.0.s8 %v429
      %v431 = vlaneseq
      %v432 = vshrl.u32 %v431, 7
      %v433 = vsub.s32 %v430, %v432
      %v434 = vrot.slane %v427, %v433
      %v436 = vunpack.c.l.s4 1983009808
      %v437 = vunpack.c.0.s8 %v436
      %v438 = vlaneseq
      %v439 = vshrl.u32 %v438, 7
      %v440 = vsub.s32 %v437, %v439
      %v441 = vrot.slane %v230, %v440
      %v442 = vcombine.high %v434, %v434
      %v443 = vcombine.high %v441, %v441
      %v444 = vcombine.low %v231, %v231
      %v446 = vunpack.c.l.s4 1983009808
      %v447 = vunpack.c.0.s8 %v446
      %v448 = vlaneseq
      %v449 = vshrl.u32 %v448, 7
      %v450 = vsub.s32 %v447, %v449
      %v451 = vrot.slane %v444, %v450
      %v453 = vunpack.c.l.s4 1983009808
      %v454 = vunpack.c.0.s8 %v453
      %v455 = vlaneseq
      %v456 = vshrl.u32 %v455, 7
      %v457 = vsub.s32 %v454, %v456
      %v458 = vrot.slane %v231, %v457
      %459 = vrot.lane.b32.xlu0 %v434, 127
      %v460 = vpop.permute.xlu0 %459
      %461 = vrot.lane.b32.xlu0 %v442, 127
      %v462 = vpop.permute.xlu0 %461
      %463 = vrot.lane.b32.xlu0 %v441, 127
      %v464 = vpop.permute.xlu0 %463
      %465 = vrot.lane.b32.xlu0 %v443, 127
      %v466 = vpop.permute.xlu0 %465
      %467 = vrot.lane.b32.xlu0 %v451, 127
      %v468 = vpop.permute.xlu0 %467
      %vm469 = vcmask 1039360
      %v470 = vsel %vm469, %v460, %v462
      %v471 = vsel %vm469, %v462, %v464
      %v472 = vsel %vm469, %v464, %v466
      %v473 = vsel %vm469, %v466, %v468
      %v476 = vcombine.high %v369, %v369
      %v478 = vunpack.c.l.s4 1983009808
      %v479 = vunpack.c.0.s8 %v478
      %v480 = vlaneseq
      %v481 = vshrl.u32 %v480, 7
      %v482 = vsub.s32 %v479, %v481
      %v483 = vrot.slane %v369, %v482
      %v485 = vunpack.c.l.s4 1983009808
      %v486 = vunpack.c.0.s8 %v485
      %v487 = vlaneseq
      %v488 = vshrl.u32 %v487, 7
      %v489 = vsub.s32 %v486, %v488
      %v490 = vrot.slane %v476, %v489
      %v491 = vcombine.low %v483, %v483
      %v492 = vcombine.low %v490, %v490
      %v494 = vunpack.c.l.s4 1983009808
      %v495 = vunpack.c.0.s8 %v494
      %v496 = vlaneseq
      %v497 = vshrl.u32 %v496, 7
      %v498 = vsub.s32 %v495, %v497
      %v499 = vrot.slane %v370, %v498
      %v500 = vcombine.low %v499, %v499
      %501 = vrot.lane.b32.xlu0 %v491, 126
      %v502 = vpop.permute.xlu0 %501
      %503 = vrot.lane.b32.xlu0 %v483, 126
      %v504 = vpop.permute.xlu0 %503
      %505 = vrot.lane.b32.xlu0 %v492, 126
      %v506 = vpop.permute.xlu0 %505
      %507 = vrot.lane.b32.xlu0 %v490, 126
      %v508 = vpop.permute.xlu0 %507
      %509 = vrot.lane.b32.xlu0 %v500, 126
      %v510 = vpop.permute.xlu0 %509
      %vm511 = vcmask 1031168
      %v512 = vsel %vm511, %v502, %v504
      %v513 = vsel %vm511, %v504, %v506
      %v514 = vsel %vm511, %v506, %v508
      %v515 = vsel %vm511, %v508, %v510
      %v518 = vcombine.low %v378, %v378
      %v520 = vunpack.c.l.s4 1983009808
      %v521 = vunpack.c.0.s8 %v520
      %v522 = vlaneseq
      %v523 = vshrl.u32 %v522, 7
      %v524 = vsub.s32 %v521, %v523
      %v525 = vrot.slane %v518, %v524
      %v527 = vunpack.c.l.s4 1983009808
      %v528 = vunpack.c.0.s8 %v527
      %v529 = vlaneseq
      %v530 = vshrl.u32 %v529, 7
      %v531 = vsub.s32 %v528, %v530
      %v532 = vrot.slane %v378, %v531
      %v533 = vcombine.low %v525, %v525
      %v534 = vcombine.low %v532, %v532
      %v535 = vcombine.low %v379, %v379
      %v537 = vunpack.c.l.s4 1983009808
      %v538 = vunpack.c.0.s8 %v537
      %v539 = vlaneseq
      %v540 = vshrl.u32 %v539, 7
      %v541 = vsub.s32 %v538, %v540
      %v542 = vrot.slane %v535, %v541
      %v543 = vcombine.low %v542, %v542
      %544 = vrot.lane.b32.xlu0 %v533, 96
      %v545 = vpop.permute.xlu0 %544
      %546 = vrot.lane.b32.xlu0 %v525, 96
      %v547 = vpop.permute.xlu0 %546
      %548 = vrot.lane.b32.xlu0 %v534, 96
      %v549 = vpop.permute.xlu0 %548
      %550 = vrot.lane.b32.xlu0 %v532, 96
      %v551 = vpop.permute.xlu0 %550
      %552 = vrot.lane.b32.xlu0 %v543, 96
      %v553 = vpop.permute.xlu0 %552
      %vm554 = vcmask 785408
      %v555 = vsel %vm554, %v545, %v547
      %v556 = vsel %vm554, %v547, %v549
      %v557 = vsel %vm554, %v549, %v551
      %v558 = vsel %vm554, %v551, %v553
      %v559 = vcombine.high %v230, %v230
      %v561 = vunpack.c.l.s4 1983009808
      %v562 = vunpack.c.0.s8 %v561
      %v563 = vlaneseq
      %v564 = vshrl.u32 %v563, 7
      %v565 = vsub.s32 %v562, %v564
      %v566 = vrot.slane %v559, %v565
      %v567 = vcombine.high %v566, %v566
      %568 = vrot.lane.b32.xlu0 %v441, 95
      %v569 = vpop.permute.xlu0 %568
      %570 = vrot.lane.b32.xlu0 %v443, 95
      %v571 = vpop.permute.xlu0 %570
      %572 = vrot.lane.b32.xlu0 %v566, 95
      %v573 = vpop.permute.xlu0 %572
      %574 = vrot.lane.b32.xlu0 %v567, 95
      %v575 = vpop.permute.xlu0 %574
      %576 = vrot.lane.b32.xlu0 %v458, 95
      %v577 = vpop.permute.xlu0 %576
      %vm578 = vcmask 777216
      %v579 = vsel %vm578, %v569, %v571
      %v580 = vsel %vm578, %v571, %v573
      %v581 = vsel %vm578, %v573, %v575
      %v582 = vsel %vm578, %v575, %v577
      %v585 = vcombine.low %v387, %v387
      %v587 = vunpack.c.l.s4 1983009808
      %v588 = vunpack.c.0.s8 %v587
      %v589 = vlaneseq
      %v590 = vshrl.u32 %v589, 7
      %v591 = vsub.s32 %v588, %v590
      %v592 = vrot.slane %v585, %v591
      %v594 = vunpack.c.l.s4 1983009808
      %v595 = vunpack.c.0.s8 %v594
      %v596 = vlaneseq
      %v597 = vshrl.u32 %v596, 7
      %v598 = vsub.s32 %v595, %v597
      %v599 = vrot.slane %v387, %v598
      %v600 = vcombine.high %v592, %v592
      %v601 = vcombine.high %v599, %v599
      %v602 = vcombine.low %v388, %v388
      %v604 = vunpack.c.l.s4 1983009808
      %v605 = vunpack.c.0.s8 %v604
      %v606 = vlaneseq
      %v607 = vshrl.u32 %v606, 7
      %v608 = vsub.s32 %v605, %v607
      %v609 = vrot.slane %v602, %v608
      %610 = vrot.lane.b32.xlu0 %v592, 94
      %v611 = vpop.permute.xlu0 %610
      %612 = vrot.lane.b32.xlu0 %v600, 94
      %v613 = vpop.permute.xlu0 %612
      %614 = vrot.lane.b32.xlu0 %v599, 94
      %v615 = vpop.permute.xlu0 %614
      %616 = vrot.lane.b32.xlu0 %v601, 94
      %v617 = vpop.permute.xlu0 %616
      %618 = vrot.lane.b32.xlu0 %v609, 94
      %v619 = vpop.permute.xlu0 %618
      %vm620 = vcmask 769024
      %v621 = vsel %vm620, %v611, %v613
      %v622 = vsel %vm620, %v613, %v615
      %v623 = vsel %vm620, %v615, %v617
      %v624 = vsel %vm620, %v617, %v619
      %v627 = vcombine.high %v396, %v396
      %v629 = vunpack.c.l.s4 1983009808
      %v630 = vunpack.c.0.s8 %v629
      %v631 = vlaneseq
      %v632 = vshrl.u32 %v631, 7
      %v633 = vsub.s32 %v630, %v632
      %v634 = vrot.slane %v396, %v633
      %v636 = vunpack.c.l.s4 1983009808
      %v637 = vunpack.c.0.s8 %v636
      %v638 = vlaneseq
      %v639 = vshrl.u32 %v638, 7
      %v640 = vsub.s32 %v637, %v639
      %v641 = vrot.slane %v627, %v640
      %v642 = vcombine.low %v634, %v634
      %v643 = vcombine.low %v641, %v641
      %v645 = vunpack.c.l.s4 1983009808
      %v646 = vunpack.c.0.s8 %v645
      %v647 = vlaneseq
      %v648 = vshrl.u32 %v647, 7
      %v649 = vsub.s32 %v646, %v648
      %v650 = vrot.slane %v397, %v649
      %v651 = vcombine.low %v650, %v650
      %652 = vrot.lane.b32.xlu0 %v642, 64
      %v653 = vpop.permute.xlu0 %652
      %654 = vrot.lane.b32.xlu0 %v634, 64
      %v655 = vpop.permute.xlu0 %654
      %656 = vrot.lane.b32.xlu0 %v643, 64
      %v657 = vpop.permute.xlu0 %656
      %658 = vrot.lane.b32.xlu0 %v641, 64
      %v659 = vpop.permute.xlu0 %658
      %660 = vrot.lane.b32.xlu0 %v651, 64
      %v661 = vpop.permute.xlu0 %660
      %v662 = vsel %vm392, %v653, %v655
      %v663 = vsel %vm392, %v655, %v657
      %v664 = vsel %vm392, %v657, %v659
      %v665 = vsel %vm392, %v659, %v661
      %v666 = vcombine.low %v434, %v434
      %v667 = vcombine.low %v441, %v441
      %v668 = vcombine.low %v451, %v451
      %669 = vrot.lane.b32.xlu0 %v666, 63
      %v670 = vpop.permute.xlu0 %669
      %671 = vrot.lane.b32.xlu0 %v434, 63
      %v672 = vpop.permute.xlu0 %671
      %673 = vrot.lane.b32.xlu0 %v667, 63
      %v674 = vpop.permute.xlu0 %673
      %675 = vrot.lane.b32.xlu0 %v441, 63
      %v676 = vpop.permute.xlu0 %675
      %677 = vrot.lane.b32.xlu0 %v668, 63
      %v678 = vpop.permute.xlu0 %677
      %vm679 = vcmask 515072
      %v680 = vsel %vm679, %v670, %v672
      %v681 = vsel %vm679, %v672, %v674
      %v682 = vsel %vm679, %v674, %v676
      %v683 = vsel %vm679, %v676, %v678
      %v686 = vcombine.high %v405, %v405
      %v688 = vunpack.c.l.s4 1983009808
      %v689 = vunpack.c.0.s8 %v688
      %v690 = vlaneseq
      %v691 = vshrl.u32 %v690, 7
      %v692 = vsub.s32 %v689, %v691
      %v693 = vrot.slane %v405, %v692
      %v695 = vunpack.c.l.s4 1983009808
      %v696 = vunpack.c.0.s8 %v695
      %v697 = vlaneseq
      %v698 = vshrl.u32 %v697, 7
      %v699 = vsub.s32 %v696, %v698
      %v700 = vrot.slane %v686, %v699
      %v701 = vcombine.high %v693, %v693
      %v702 = vcombine.high %v700, %v700
      %v704 = vunpack.c.l.s4 1983009808
      %v705 = vunpack.c.0.s8 %v704
      %v706 = vlaneseq
      %v707 = vshrl.u32 %v706, 7
      %v708 = vsub.s32 %v705, %v707
      %v709 = vrot.slane %v406, %v708
      %710 = vrot.lane.b32.xlu0 %v693, 62
      %v711 = vpop.permute.xlu0 %710
      %712 = vrot.lane.b32.xlu0 %v701, 62
      %v713 = vpop.permute.xlu0 %712
      %714 = vrot.lane.b32.xlu0 %v700, 62
      %v715 = vpop.permute.xlu0 %714
      %716 = vrot.lane.b32.xlu0 %v702, 62
      %v717 = vpop.permute.xlu0 %716
      %718 = vrot.lane.b32.xlu0 %v709, 62
      %v719 = vpop.permute.xlu0 %718
      %vm720 = vcmask 506880
      %v721 = vsel %vm720, %v711, %v713
      %v722 = vsel %vm720, %v713, %v715
      %v723 = vsel %vm720, %v715, %v717
      %v724 = vsel %vm720, %v717, %v719
      %vm725 = vcmask 1041408
      %v728 = vsel %vm725, %v415, %v470
      %v731 = vsel %vm725, %v423, %v471
      %v734 = vsel %vm725, %v422, %v472
      %v737 = vsel %vm725, %v424, %v473
      %vm738 = vcmask 1043456
      %v740 = vsel %vm738, %v728, %v512
      %v742 = vsel %vm738, %v731, %v513
      %v744 = vsel %vm738, %v734, %v514
      %v746 = vsel %vm738, %v737, %v515
      %vm747 = vcmask 1045504
      %v749 = vsel %vm747, %v740, %v555
      %v752 = vsel %vm747, %v742, %v556
      %v755 = vsel %vm747, %v744, %v557
      %v758 = vsel %vm747, %v746, %v558
      %v762 = vsel %vm725, %v579, %v621
      %v765 = vsel %vm725, %v580, %v622
      %v768 = vsel %vm725, %v581, %v623
      %v771 = vsel %vm725, %v582, %v624
      %v773 = vsel %vm738, %v762, %v662
      %v775 = vsel %vm738, %v765, %v663
      %v777 = vsel %vm738, %v768, %v664
      %v779 = vsel %vm738, %v771, %v665
      %v781 = vsel %vm747, %v773, %v680
      %v784 = vsel %vm747, %v775, %v681
      %v787 = vsel %vm747, %v777, %v682
      %v790 = vsel %vm747, %v779, %v683
      %vm792 = vcmask 293888
      %v794 = vsel %vm792, %v232, 0
      %v797 = vsel %vm725, %v721, 0
      %v800 = vsel %vm725, %v722, 0
      %v803 = vsel %vm725, %v723, 0
      %v806 = vsel %vm725, %v724, 0
      %808 = vmatprep.subr.bf16.mxu0 0
      %809 = vmatpush1.bf16.msra.mxu0 0
      %810 = vmatprep.subr.bf16.mxu0 0
      %811 = vmatpush1.bf16.msra.mxu0 0
      %812 = vmatprep.subr.bf16.mxu0 0
      %813 = vmatpush1.bf16.msra.mxu0 0
      %814 = vmatprep.subr.bf16.mxu0 0
      %815 = vmatpush1.bf16.msra.mxu0 0
      %816 = vmatprep.subr.bf16.mxu0 0
      %817 = vmatpush1.bf16.msra.mxu0 0
      %818 = vmatprep.subr.bf16.mxu0 %v800
      %819 = vmatpush1.bf16.msra.mxu0 %v797
      %820 = vmatprep.subr.bf16.mxu0 %v784
      %821 = vmatpush1.bf16.msra.mxu0 %v781
      %822 = vmatprep.subr.bf16.mxu0 %v752
      %823 = vmatpush1.bf16.msra.mxu0 %v749
      %824 = vmatprep.subr.bf16.mxu0 0
      %825 = vmatpush2.bf16.msra.mxu0 0
      %826 = vmatprep.subr.bf16.mxu0 0
      %827 = vmatpush2.bf16.msra.mxu0 0
      %828 = vmatprep.subr.bf16.mxu0 0
      %829 = vmatpush2.bf16.msra.mxu0 0
      %830 = vmatprep.subr.bf16.mxu0 0
      %831 = vmatpush2.bf16.msra.mxu0 0
      %832 = vmatprep.subr.bf16.mxu0 0
      %833 = vmatpush2.bf16.msra.mxu0 0
      %834 = vmatprep.subr.bf16.mxu0 0
      %835 = vmatpush2.bf16.msra.mxu0 0
      %836 = vmatprep.subr.bf16.mxu0 0
      %837 = vmatpush2.bf16.msra.mxu0 0
      %838 = vmatprep.subr.bf16.mxu0 0
      %839 = vmatpush2.bf16.msra.mxu0 0
      %840 = vmatprep.mubr.bf16.mxu0 0
      %841 = vmatmul.mubr.bf16.gmra.mxu0 %v794
      %v842 = vpop.f32.mrf.mxu0
      %v843 = vadd.f32 0.0, %v842
      %v844 = vpop.f32.mrf.mxu0
      %v845 = vadd.f32 0.0, %v844
      %v846 = vpop.f32.mrf.mxu0
      %v847 = vpop.f32.mrf.mxu0
      %848 = vdwg.mxu0
      %849 = vmatprep.subr.bf16.mxu0 0
      %850 = vmatpush1.bf16.msra.mxu0 0
      %851 = vmatprep.subr.bf16.mxu0 0
      %852 = vmatpush1.bf16.msra.mxu0 0
      %853 = vmatprep.subr.bf16.mxu0 0
      %854 = vmatpush1.bf16.msra.mxu0 0
      %855 = vmatprep.subr.bf16.mxu0 0
      %856 = vmatpush1.bf16.msra.mxu0 0
      %857 = vmatprep.subr.bf16.mxu0 0
      %858 = vmatpush1.bf16.msra.mxu0 0
      %859 = vmatprep.subr.bf16.mxu0 %v806
      %860 = vmatpush1.bf16.msra.mxu0 %v803
      %861 = vmatprep.subr.bf16.mxu0 %v790
      %862 = vmatpush1.bf16.msra.mxu0 %v787
      %863 = vmatprep.subr.bf16.mxu0 %v758
      %864 = vmatpush1.bf16.msra.mxu0 %v755
      %865 = vmatprep.subr.bf16.mxu0 0
      %866 = vmatpush2.bf16.msra.mxu0 0
      %867 = vmatprep.subr.bf16.mxu0 0
      %868 = vmatpush2.bf16.msra.mxu0 0
      %869 = vmatprep.subr.bf16.mxu0 0
      %870 = vmatpush2.bf16.msra.mxu0 0
      %871 = vmatprep.subr.bf16.mxu0 0
      %872 = vmatpush2.bf16.msra.mxu0 0
      %873 = vmatprep.subr.bf16.mxu0 0
      %874 = vmatpush2.bf16.msra.mxu0 0
      %875 = vmatprep.subr.bf16.mxu0 0
      %876 = vmatpush2.bf16.msra.mxu0 0
      %877 = vmatprep.subr.bf16.mxu0 0
      %878 = vmatpush2.bf16.msra.mxu0 0
      %879 = vmatprep.subr.bf16.mxu0 0
      %880 = vmatpush2.bf16.msra.mxu0 0
      %881 = vmatprep.mubr.bf16.mxu0 0
      %882 = vmatmul.mubr.bf16.gmra.mxu0 %v794
      %v883 = vpop.f32.mrf.mxu0
      %v884 = vadd.f32 0.0, %v883
      %v885 = vpop.f32.mrf.mxu0
      %v886 = vadd.f32 0.0, %v885
      %v887 = vpop.f32.mrf.mxu0
      %v888 = vpop.f32.mrf.mxu0
      %889 = vdwg.mxu0
      %v890 = vpack.c.bf16 %v843, %v843
      %v891 = vpack.c.bf16 %v845, %v845
      %v892 = vpack.c.bf16 %v884, %v884
      %v893 = vpack.c.bf16 %v886, %v886
      %v898 = vunpack.c.l.b16 %v890
      %v899 = vunpack.c.l.b16 %v891
      %v900 = vunpack.c.l.b16 %v892
      %v901 = vunpack.c.l.b16 %v893
      %v902 = vpack.c.b16 %v899, %v898
      %v903 = vpack.c.b16 %v901, %v900
      %906 = vst [vmem:[%s219] sm:$0xff] %v902
      %907 = vst [vmem:[%s219 + $0x8] sm:$0xff] %v903
      %v908 = vadd.f32 %v843, %v845
      %v909 = vadd.f32 %v908, %v884
      %v910 = vadd.f32 %v909, %v886
      %911 = vadd.xlane.f32.xlu0 %v910
      %v912 = vpop.xlane.xlu0 %911
      %v913 = vmul.f32 %v843, %v843
      %v914 = vmul.f32 %v845, %v845
      %v915 = vmul.f32 %v884, %v884
      %v916 = vmul.f32 %v886, %v886
      %v917 = vadd.f32 %v913, %v914
      %v918 = vadd.f32 %v917, %v915
      %v919 = vadd.f32 %v918, %v916
      %920 = vadd.xlane.f32.xlu0 %v919
      %v921 = vpop.xlane.xlu0 %920
      %vm922 = vcmask 7168
      %v923 = vsel %vm922, %v912, %v921
      %vm924 = vcmask 15360
      %925 = vst.msk [vmem:[%s228] sm:$0xff] %vm924, %v923
      %s926 = smul.u32 4, %s20
      %p927 = scmp.lt.s32.totalorder %s19, 1
      %s928 = scalar_select %p927, %s19, 1
      %p929 = scmp.lt.s32.totalorder %s926, 7
      %s930 = scalar_select %p929, %s926, 7
      %s931 = smul.addr %s928, 8
      %s932 = sadd.s32 %s930, %s931
      %s933 = smul.addr %s932, 4
      %s934 = scalar_lea.vmem %s2, %s933
      %p935 = scmp.lt.s32.totalorder %s19, 1
      %s936 = scalar_select %p935, %s19, 1
      %p937 = scmp.lt.s32.totalorder %s20, 1
      %s938 = scalar_select %p937, %s20, 1
      %s939 = smul.addr %s936, 2
      %s940 = sadd.s32 %s938, %s939
      %s941 = smul.addr %s940, 8
      %s942 = scalar_lea.vmem %s3, %s941
      // Predicated region
      $region29: #{upsample_conv_forward.3} parent=27 // pred_check
        %p943 = pneg %p96
      $region30: #{upsample_conv_forward.3} parent=27 // pred_check_branch
        %945 = sbr.rel (%p943) target = $region32
      $region31: #{upsample_conv_forward.3} parent=27 // pred_region
        %s946 = smul.u32 4, %s20
      $region32: #{upsample_conv_forward.3} parent=27 // pred_fallthru
        _
      // Predicated region
      $region33: #{upsample_conv_forward.3} parent=27 // pred_check
        %p947 = pneg %p124
      $region34: #{upsample_conv_forward.3} parent=27 // pred_check_branch
        %949 = sbr.rel (%p947) target = $region36
      $region35: #{upsample_conv_forward.3} parent=27 // pred_region
        _
      $region36: #{upsample_conv_forward.3} parent=27 // pred_fallthru
        _
    $region28: #{upsample_conv_forward.3} parent=5 // pred_fallthru
      _
    %p950 = scmp.le.s32.totalorder 2, %s10
    // Predicated region
    $region37: #{upsample_conv_forward.3} parent=5 // pred_check
      %p951 = pneg %p950
    $region38: #{upsample_conv_forward.3} parent=5 // pred_check_branch
      %953 = sbr.rel (%p951) target = $region40
    $region39: #{upsample_conv_forward.3} parent=5 // pred_region
      %s954 = ssub.s32 %s10, 2
      // Predicated region
      $region41: #{upsample_conv_forward.3} parent=39 // pred_check
        %p955 = pneg %p102
      $region42: #{upsample_conv_forward.3} parent=39 // pred_check_branch
        %957 = sbr.rel (%p955) target = $region44
      $region43: #{upsample_conv_forward.3} parent=39 // pred_region
        %s958 = smul.u32 4, %s22
        %p959 = scmp.lt.s32.totalorder %s21, 1
        %s960 = scalar_select %p959, %s21, 1
        %p961 = scmp.lt.s32.totalorder %s958, 7
        %s962 = scalar_select %p961, %s958, 7
        %s963 = smul.addr %s960, 8
        %s964 = sadd.s32 %s962, %s963
        %s965 = smul.addr %s964, 4
        %s966 = scalar_lea.vmem %s2, %s965
      $region44: #{upsample_conv_forward.3} parent=39 // pred_fallthru
        _
      // Predicated region
      $region45: #{upsample_conv_forward.3} parent=39 // pred_check
        %p967 = pneg %p130
      $region46: #{upsample_conv_forward.3} parent=39 // pred_check_branch
        %969 = sbr.rel (%p967) target = $region48
      $region47: #{upsample_conv_forward.3} parent=39 // pred_region
        %p970 = scmp.lt.s32.totalorder %s21, 1
        %s971 = scalar_select %p970, %s21, 1
        %p972 = scmp.lt.s32.totalorder %s22, 1
        %s973 = scalar_select %p972, %s22, 1
        %s974 = smul.addr %s971, 2
        %s975 = sadd.s32 %s973, %s974
        %s976 = smul.addr %s975, 8
        %s977 = scalar_lea.vmem %s3, %s976
      $region48: #{upsample_conv_forward.3} parent=39 // pred_fallthru
        _
    $region40: #{upsample_conv_forward.3} parent=5 // pred_fallthru
      _
  $region6: #{upsample_conv_forward.3} parent=0 // loop_footer
    %s14 = sadd.s32 1, %s10
  $region7: #{upsample_conv_forward.3} parent=0 // loop_footer_branch
    %9 = sbr.rel target = $region3
  $region8: #{upsample_conv_forward.3} parent=0 // loop_exit
    _

// kernel: upsample_conv_forward.5
$region0: #{upsample_conv_forward.5}
  #allocation0 [shape = 'u32[]', space=smem, size = 0x4, offset = 0x4, fixed_abs, tag = 'smem constant byte address 0x4 - core index']
  #allocation1 [shape = 'u32[144,128]{1,0:T(1,128)}', space=vmem, size = 0x12000, scoped, tag = 'internal scratch']
  %s0 = inlined_call_operand.vmem [shape: bf16[2,8,1024], index: 0, kind: input, shape index: {}]
  %s1 = inlined_call_operand.vmem [shape: f32[8,1], index: 1, kind: input, shape index: {}]
  %s2 = inlined_call_operand.vmem [shape: f32[8,1], index: 2, kind: input, shape index: {}]
  %s3 = inlined_call_operand.vmem [shape: f32[2,8,1024], index: 3, kind: output, shape index: {}]
  %s4 = sld [smem:[#allocation0]]
  $region45: #{upsample_conv_forward.5} parent=0
    _
  %s6 = ssub.s32 1, %s4
  %s7 = scalar_select 0, %s6, %s4
  loop: start=0, step=1, limit=6
  $region2: #{upsample_conv_forward.5} parent=0 // loop_pre_header
    _
  $region3: #{upsample_conv_forward.5} parent=0 // loop_header
    %s9 = sphi 0, %s13
    %p10 = scmp.ge.s32.totalorder %s9, 6
    %s16 = sphi 0, %s28
    %s17 = sphi 0, %s24
    %s18 = sphi 0, %s16
    %s19 = sphi 0, %s17
    %s20 = sphi 0, %s18
    %s21 = sphi 0, %s19
    %s33 = sphi 0, %s35
    %s36 = sphi 0, %s33
    %s37 = sphi 0, %s36
    %s53 = sphi 0, %s37
    %s57 = sphi 0, %s57
    %s59 = sphi 0, %s57
    %s60 = sphi 0, %s59
    %s74 = sphi 0, %s60
    %s78 = sphi 0, %s78
    %s80 = sphi 0, %s78
    %s81 = sphi 0, %s80
    %s95 = sphi 0, %s81
    %s103 = sphi 0, %s105
    %s106 = sphi 0, %s103
    %s107 = sphi 0, %s106
    %s123 = sphi 0, %s107
  $region4: #{upsample_conv_forward.5} parent=0 // loop_header_branch
    %12 = sbr.rel (%p10) target = $region8
  $region5: #{upsample_conv_forward.5} parent=0 // loop_body
    %s14 = ssub.s32 %s9, 1
    %s15 = ssub.s32 %s9, 2
    %s22 = sadd.s32 1, %s17
    %p23 = scmp.ge.s32.totalorder %s22, 2
    %s24 = scalar_select %p23, 0, %s22
    %s25 = sadd.s32 1, %s16
    %s26 = scalar_select %p23, %s25, %s16
    %p27 = scmp.ge.s32.totalorder %s26, 2
    %s28 = scalar_select %p27, 0, %s26
    %s29 = ssub.s32 %s16, %s28
    %s30 = ssub.s32 %s17, %s24
    %s31 = sor.u32 %s29, %s30
    %p32 = scmp.eq.s32.totalorder %s31, 0
    %s34 = sadd.s32 %s33, 1
    %s35 = scalar_select %p32, %s33, %s34
    %p38 = pneg %p32
    %p39 = scmp.eq.s32.totalorder %s9, 3
    %p40 = por %p38, %p39
    %p41 = scmp.ne.s32.totalorder %s33, %s36
    %p42 = scmp.eq.s32.totalorder %s9, 0
    %p43 = por %p41, %p42
    %p44 = scmp.ne.s32.totalorder %s33, %s36
    %p45 = scmp.eq.s32.totalorder %s14, 3
    %p46 = por %p44, %p45
    %p47 = scmp.ne.s32.totalorder %s36, %s37
    %p48 = scmp.eq.s32.totalorder %s14, 0
    %p49 = por %p47, %p48
    %p50 = scmp.ne.s32.totalorder %s36, %s37
    %p51 = scmp.eq.s32.totalorder %s15, 3
    %p52 = por %p50, %p51
    %p54 = scmp.ne.s32.totalorder %s37, %s53
    %p55 = scmp.eq.s32.totalorder %s15, 0
    %p56 = por %p54, %p55
    %s58 = sadd.s32 %s57, 1
    %p61 = scmp.eq.s32.totalorder %s9, 3
    %p62 = scmp.ne.s32.totalorder %s57, %s59
    %p63 = scmp.eq.s32.totalorder %s9, 0
    %p64 = por %p62, %p63
    %p65 = scmp.ne.s32.totalorder %s57, %s59
    %p66 = scmp.eq.s32.totalorder %s14, 3
    %p67 = por %p65, %p66
    %p68 = scmp.ne.s32.totalorder %s59, %s60
    %p69 = scmp.eq.s32.totalorder %s14, 0
    %p70 = por %p68, %p69
    %p71 = scmp.ne.s32.totalorder %s59, %s60
    %p72 = scmp.eq.s32.totalorder %s15, 3
    %p73 = por %p71, %p72
    %p75 = scmp.ne.s32.totalorder %s60, %s74
    %p76 = scmp.eq.s32.totalorder %s15, 0
    %p77 = por %p75, %p76
    %s79 = sadd.s32 %s78, 1
    %p82 = scmp.eq.s32.totalorder %s9, 3
    %p83 = scmp.ne.s32.totalorder %s78, %s80
    %p84 = scmp.eq.s32.totalorder %s9, 0
    %p85 = por %p83, %p84
    %p86 = scmp.ne.s32.totalorder %s78, %s80
    %p87 = scmp.eq.s32.totalorder %s14, 3
    %p88 = por %p86, %p87
    %p89 = scmp.ne.s32.totalorder %s80, %s81
    %p90 = scmp.eq.s32.totalorder %s14, 0
    %p91 = por %p89, %p90
    %p92 = scmp.ne.s32.totalorder %s80, %s81
    %p93 = scmp.eq.s32.totalorder %s15, 3
    %p94 = por %p92, %p93
    %p96 = scmp.ne.s32.totalorder %s81, %s95
    %p97 = scmp.eq.s32.totalorder %s15, 0
    %p98 = por %p96, %p97
    %s99 = ssub.s32 %s16, %s28
    %s100 = ssub.s32 %s17, %s24
    %s101 = sor.u32 %s99, %s100
    %p102 = scmp.eq.s32.totalorder %s101, 0
    %s104 = sadd.s32 %s103, 1
    %s105 = scalar_select %p102, %s103, %s104
    %p108 = pneg %p102
    %p109 = scmp.eq.s32.totalorder %s9, 3
    %p110 = por %p108, %p109
    %p111 = scmp.ne.s32.totalorder %s103, %s106
    %p112 = scmp.eq.s32.totalorder %s9, 0
    %p113 = por %p111, %p112
    %p114 = scmp.ne.s32.totalorder %s103, %s106
    %p115 = scmp.eq.s32.totalorder %s14, 3
    %p116 = por %p114, %p115
    %p117 = scmp.ne.s32.totalorder %s106, %s107
    %p118 = scmp.eq.s32.totalorder %s14, 0
    %p119 = por %p117, %p118
    %p120 = scmp.ne.s32.totalorder %s106, %s107
    %p121 = scmp.eq.s32.totalorder %s15, 3
    %p122 = por %p120, %p121
    %p124 = scmp.ne.s32.totalorder %s107, %s123
    %p125 = scmp.eq.s32.totalorder %s15, 0
    %p126 = por %p124, %p125
    %p127 = scmp.le.s32.totalorder 1, %s9
    %p128 = scmp.lt.s32.totalorder %s9, 5
    %p129 = pnand %p127, %p128
    %p130 = pneg %p129
    // Predicated region
    $region9: #{upsample_conv_forward.5} parent=5 // pred_check
      _
    $region10: #{upsample_conv_forward.5} parent=5 // pred_check_branch
      %132 = sbr.rel (%p129) target = $region12
    $region11: #{upsample_conv_forward.5} parent=5 // pred_region
      %s133 = ssub.s32 %s9, 1
      // Predicated region
      $region13: #{upsample_conv_forward.5} parent=11 // pred_check
        %p134 = pneg %p70
      $region14: #{upsample_conv_forward.5} parent=11 // pred_check_branch
        %136 = sbr.rel (%p134) target = $region16
      $region15: #{upsample_conv_forward.5} parent=11 // pred_region
        _
      $region16: #{upsample_conv_forward.5} parent=11 // pred_fallthru
        _
      // Predicated region
      $region17: #{upsample_conv_forward.5} parent=11 // pred_check
        %p137 = pneg %p91
      $region18: #{upsample_conv_forward.5} parent=11 // pred_check_branch
        %139 = sbr.rel (%p137) target = $region20
      $region19: #{upsample_conv_forward.5} parent=11 // pred_region
        _
      $region20: #{upsample_conv_forward.5} parent=11 // pred_fallthru
        _
    $region12: #{upsample_conv_forward.5} parent=5 // pred_fallthru
      _
    %p140 = scmp.lt.s32.totalorder %s9, 4
    // Predicated region
    $region21: #{upsample_conv_forward.5} parent=5 // pred_check
      %p141 = pneg %p140
    $region22: #{upsample_conv_forward.5} parent=5 // pred_check_branch
      %143 = sbr.rel (%p141) target = $region24
    $region23: #{upsample_conv_forward.5} parent=5 // pred_region
      // Predicated region
      $region25: #{upsample_conv_forward.5} parent=23 // pred_check
        %p144 = pneg %p43
      $region26: #{upsample_conv_forward.5} parent=23 // pred_check_branch
        %146 = sbr.rel (%p144) target = $region28
      $region27: #{upsample_conv_forward.5} parent=23 // pred_region
        %s147 = smul.u32 4, %s17
        %p148 = scmp.lt.s32.totalorder %s16, 1
        %s149 = scalar_select %p148, %s16, 1
        %p150 = scmp.lt.s32.totalorder %s147, 7
        %s151 = scalar_select %p150, %s147, 7
        %s152 = smul.addr %s149, 8
        %s153 = sadd.s32 %s151, %s152
        %s154 = smul.addr %s153, 4
        %s155 = scalar_lea.vmem %s0, %s154
        %s156 = smul.u32 4, %s17
      $region28: #{upsample_conv_forward.5} parent=23 // pred_fallthru
        _
    $region24: #{upsample_conv_forward.5} parent=5 // pred_fallthru
      _
    %p157 = scmp.le.s32.totalorder 1, %s9
    %p158 = scmp.lt.s32.totalorder %s9, 5
    %p159 = pnand %p157, %p158
    %p160 = pneg %p159
    // Predicated region
    $region29: #{upsample_conv_forward.5} parent=5 // pred_check
      _
    $region30: #{upsample_conv_forward.5} parent=5 // pred_check_branch
      %162 = sbr.rel (%p159) target = $region32
    $region31: #{upsample_conv_forward.5} parent=5 // pred_region
      %s163 = ssub.s32 %s9, 1
      %s164 = smul.u32 4, %s19
      %p165 = scmp.lt.s32.totalorder %s18, 1
      %s166 = scalar_select %p165, %s18, 1
      %p167 = scmp.lt.s32.totalorder %s164, 7
      %s168 = scalar_select %p167, %s164, 7
      %s169 = smul.addr %s166, 8
      %s170 = sadd.s32 %s168, %s169
      %s171 = smul.addr %s170, 4
      %s172 = scalar_lea.vmem %s0, %s171
      %p173 = pneg %p49
      %p174 = pneg %p46
      %p175 = pneg %p70
      %p176 = pneg %p67
      %p177 = pneg %p91
      %p178 = pneg %p88
      %p179 = pneg %p119
      %p180 = pneg %p116
      %s181 = smul.u32 4, %s19
      %p182 = scmp.lt.s32.totalorder %s18, 1
      %s183 = scalar_select %p182, %s18, 1
      %p184 = scmp.lt.s32.totalorder %s181, 7
      %s185 = scalar_select %p184, %s181, 7
      %s186 = smul.addr %s183, 8
      %s187 = sadd.s32 %s185, %s186
      %s188 = smul.addr %s187, 8
      %s189 = scalar_lea.vmem %s3, %s188
      %s190 = smul.u32 4, %s19
      %p191 = scmp.lt.s32.totalorder %s18, 1
      %s192 = scalar_select %p191, %s18, 1
      %p193 = scmp.lt.s32.totalorder %s190, 7
      %s194 = scalar_select %p193, %s190, 7
      %s195 = smul.addr %s192, 8
      %s196 = sadd.s32 %s194, %s195
      %s197 = smul.addr %s196, 4
      %s198 = scalar_lea.vmem %s0, %s197
      %s199 = smul.u32 4, %s19
      %s200 = smul.u32 4, %s19
      %p201 = scmp.lt.s32.totalorder %s18, 1
      %s202 = scalar_select %p201, %s18, 1
      %p203 = scmp.lt.s32.totalorder %s200, 7
      %s204 = scalar_select %p203, %s200, 7
      %s205 = smul.addr %s202, 8
      %s206 = sadd.s32 %s204, %s205
      %s207 = smul.addr %s206, 8
      %s208 = scalar_lea.vmem %s3, %s207
      %s209 = smul.u32 4, %s19
      %v210 = vld [vmem:[%s198] sm:$0xff]
      %v211 = vld [vmem:[%s198 + $0x8] sm:$0xff]
      %v212 = vunpack.c.l.bf16 %v210
      %v213 = vunpack.c.h.bf16 %v210
      %v214 = vunpack.c.l.bf16 %v211
      %v215 = vunpack.c.h.bf16 %v211
      %v216 = vld [vmem:[%s1] sm:$0xff]
      %218 = vset.pattern.permute.xlu0 0
      %219 = vperm.xlu0 %218, %v216
      %v220 = vpop.permute.xlu0 %219
      %v222 = vmul.f32 %v212, %v220
      %v223 = vmul.f32 %v213, %v220
      %v224 = vmul.f32 %v214, %v220
      %v225 = vmul.f32 %v215, %v220
      %v226 = vld [vmem:[%s2] sm:$0xff]
      %228 = vset.pattern.permute.xlu0 0
      %229 = vperm.xlu0 %228, %v226
      %v230 = vpop.permute.xlu0 %229
      %v232 = vadd.f32 %v222, %v230
      %v233 = vadd.f32 %v223, %v230
      %v234 = vadd.f32 %v224, %v230
      %v235 = vadd.f32 %v225, %v230
      %v236 = vmax.f32 %v232, 0.0
      %v237 = vmax.f32 %v233, 0.0
      %v238 = vmax.f32 %v234, 0.0
      %v239 = vmax.f32 %v235, 0.0
      %240 = vst [vmem:[%s208] sm:$0xff] %v236
      %241 = vst [vmem:[%s208 + $0x8] sm:$0xff] %v237
      %242 = vst [vmem:[%s208 + $0x10] sm:$0xff] %v238
      %243 = vst [vmem:[%s208 + $0x18] sm:$0xff] %v239
      %s244 = smul.u32 4, %s19
      %p245 = scmp.lt.s32.totalorder %s18, 1
      %s246 = scalar_select %p245, %s18, 1
      %p247 = scmp.lt.s32.totalorder %s244, 7
      %s248 = scalar_select %p247, %s244, 7
      %s249 = smul.addr %s246, 8
      %s250 = sadd.s32 %s248, %s249
      %s251 = smul.addr %s250, 8
      %s252 = scalar_lea.vmem %s3, %s251
      // Predicated region
      $region33: #{upsample_conv_forward.5} parent=31 // pred_check
        %p253 = pneg %p116
      $region34: #{upsample_conv_forward.5} parent=31 // pred_check_branch
        %255 = sbr.rel (%p253) target = $region36
      $region35: #{upsample_conv_forward.5} parent=31 // pred_region
        %s256 = smul.u32 4, %s19
      $region36: #{upsample_conv_forward.5} parent=31 // pred_fallthru
        _
    $region32: #{upsample_conv_forward.5} parent=5 // pred_fallthru
      _
    %p257 = scmp.le.s32.totalorder 2, %s9
    // Predicated region
    $region37: #{upsample_conv_forward.5} parent=5 // pred_check
      %p258 = pneg %p257
    $region38: #{upsample_conv_forward.5} parent=5 // pred_check_branch
      %260 = sbr.rel (%p258) target = $region40
    $region39: #{upsample_conv_forward.5} parent=5 // pred_region
      %s261 = ssub.s32 %s9, 2
      // Predicated region
      $region41: #{upsample_conv_forward.5} parent=39 // pred_check
        %p262 = pneg %p122
      $region42: #{upsample_conv_forward.5} parent=39 // pred_check_branch
        %264 = sbr.rel (%p262) target = $region44
      $region43: #{upsample_conv_forward.5} parent=39 // pred_region
        %s265 = smul.u32 4, %s21
        %p266 = scmp.lt.s32.totalorder %s20, 1
        %s267 = scalar_select %p266, %s20, 1
        %p268 = scmp.lt.s32.totalorder %s265, 7
        %s269 = scalar_select %p268, %s265, 7
        %s270 = smul.addr %s267, 8
        %s271 = sadd.s32 %s269, %s270
        %s272 = smul.addr %s271, 8
        %s273 = scalar_lea.vmem %s3, %s272
      $region44: #{upsample_conv_forward.5} parent=39 // pred_fallthru
        _
    $region40: #{upsample_conv_forward.5} parent=5 // pred_fallthru
      _
  $region6: #{upsample_conv_forward.5} parent=0 // loop_footer
    %s13 = sadd.s32 1, %s9
  $region7: #{upsample_conv_forward.5} parent=0 // loop_footer_branch
    %8 = sbr.rel target = $region3
  $region8: #{upsample_conv_forward.5} parent=0 // loop_exit
    _

// kernel: upsample_conv_forward.4
$region0: #{upsample_conv_forward.4}
  #allocation0 [shape = 'u32[]', space=smem, size = 0x4, offset = 0x4, fixed_abs, tag = 'smem constant byte address 0x4 - core index']
  #allocation1 [shape = 'u32[144,128]{1,0:T(1,128)}', space=vmem, size = 0x12000, scoped, tag = 'internal scratch']
  %s0 = inlined_call_operand.vmem [shape: bf16[2,2,8,578], index: 0, kind: input, shape index: {}]
  %s1 = inlined_call_operand.vmem [shape: bf16[8,72], index: 1, kind: input, shape index: {}]
  %s2 = inlined_call_operand.vmem [shape: f32[8,1], index: 2, kind: input, shape index: {}]
  %s3 = inlined_call_operand.vmem [shape: f32[8,1], index: 3, kind: input, shape index: {}]
  %s4 = inlined_call_operand.vmem [shape: bf16[2,8,1024], index: 4, kind: output, shape index: {0}]
  %s5 = inlined_call_operand.vmem [shape: f32[2,2,8,2], index: 5, kind: output, shape index: {1}]
  %6 = xla_tuple %s4, %s5
  %s7 = sld [smem:[#allocation0]]
  $region57: #{upsample_conv_forward.4} parent=0
    _
  %s9 = ssub.s32 1, %s7
  %s10 = scalar_select 0, %s9, %s7
  loop: start=0, step=1, limit=6
  $region2: #{upsample_conv_forward.4} parent=0 // loop_pre_header
    _
  $region3: #{upsample_conv_forward.4} parent=0 // loop_header
    %s12 = sphi 0, %s16
    %p13 = scmp.ge.s32.totalorder %s12, 6
    %s19 = sphi 0, %s31
    %s20 = sphi 0, %s27
    %s21 = sphi 0, %s19
    %s22 = sphi 0, %s20
    %s23 = sphi 0, %s21
    %s24 = sphi 0, %s22
    %s36 = sphi 0, %s38
    %s39 = sphi 0, %s36
    %s40 = sphi 0, %s39
    %s56 = sphi 0, %s40
    %s60 = sphi 0, %s60
    %s62 = sphi 0, %s60
    %s63 = sphi 0, %s62
    %s77 = sphi 0, %s63
    %s81 = sphi 0, %s81
    %s83 = sphi 0, %s81
    %s84 = sphi 0, %s83
    %s98 = sphi 0, %s84
    %s102 = sphi 0, %s102
    %s104 = sphi 0, %s102
    %s105 = sphi 0, %s104
    %s119 = sphi 0, %s105
    %s127 = sphi 0, %s129
    %s130 = sphi 0, %s127
    %s131 = sphi 0, %s130
    %s147 = sphi 0, %s131
    %s155 = sphi 0, %s157
    %s158 = sphi 0, %s155
    %s159 = sphi 0, %s158
    %s175 = sphi 0, %s159
  $region4: #{upsample_conv_forward.4} parent=0 // loop_header_branch
    %15 = sbr.rel (%p13) target = $region8
  $region5: #{upsample_conv_forward.4} parent=0 // loop_body
    %s17 = ssub.s32 %s12, 1
    %s18 = ssub.s32 %s12, 2
    %s25 = sadd.s32 1, %s20
    %p26 = scmp.ge.s32.totalorder %s25, 2
    %s27 = scalar_select %p26, 0, %s25
    %s28 = sadd.s32 1, %s19
    %s29 = scalar_select %p26, %s28, %s19
    %p30 = scmp.ge.s32.totalorder %s29, 2
    %s31 = scalar_select %p30, 0, %s29
    %s32 = ssub.s32 %s19, %s31
    %s33 = ssub.s32 %s20, %s27
    %s34 = sor.u32 %s32, %s33
    %p35 = scmp.eq.s32.totalorder %s34, 0
    %s37 = sadd.s32 %s36, 1
    %s38 = scalar_select %p35, %s36, %s37
    %p41 = pneg %p35
    %p42 = scmp.eq.s32.totalorder %s12, 3
    %p43 = por %p41, %p42
    %p44 = scmp.ne.s32.totalorder %s36, %s39
    %p45 = scmp.eq.s32.totalorder %s12, 0
    %p46 = por %p44, %p45
    %p47 = scmp.ne.s32.totalorder %s36, %s39
    %p48 = scmp.eq.s32.totalorder %s17, 3
    %p49 = por %p47, %p48
    %p50 = scmp.ne.s32.totalorder %s39, %s40
    %p51 = scmp.eq.s32.totalorder %s17, 0
    %p52 = por %p50, %p51
    %p53 = scmp.ne.s32.totalorder %s39, %s40
    %p54 = scmp.eq.s32.totalorder %s18, 3
    %p55 = por %p53, %p54
    %p57 = scmp.ne.s32.totalorder %s40, %s56
    %p58 = scmp.eq.s32.totalorder %s18, 0
    %p59 = por %p57, %p58
    %s61 = sadd.s32 %s60, 1
    %p64 = scmp.eq.s32.totalorder %s12, 3
    %p65 = scmp.ne.s32.totalorder %s60, %s62
    %p66 = scmp.eq.s32.totalorder %s12, 0
    %p67 = por %p65, %p66
    %p68 = scmp.ne.s32.totalorder %s60, %s62
    %p69 = scmp.eq.s32.totalorder %s17, 3
    %p70 = por %p68, %p69
    %p71 = scmp.ne.s32.totalorder %s62, %s63
    %p72 = scmp.eq.s32.totalorder %s17, 0
    %p73 = por %p71, %p72
    %p74 = scmp.ne.s32.totalorder %s62, %s63
    %p75 = scmp.eq.s32.totalorder %s18, 3
    %p76 = por %p74, %p75
    %p78 = scmp.ne.s32.totalorder %s63, %s77
    %p79 = scmp.eq.s32.totalorder %s18, 0
    %p80 = por %p78, %p79
    %s82 = sadd.s32 %s81, 1
    %p85 = scmp.eq.s32.totalorder %s12, 3
    %p86 = scmp.ne.s32.totalorder %s81, %s83
    %p87 = scmp.eq.s32.totalorder %s12, 0
    %p88 = por %p86, %p87
    %p89 = scmp.ne.s32.totalorder %s81, %s83
    %p90 = scmp.eq.s32.totalorder %s17, 3
    %p91 = por %p89, %p90
    %p92 = scmp.ne.s32.totalorder %s83, %s84
    %p93 = scmp.eq.s32.totalorder %s17, 0
    %p94 = por %p92, %p93
    %p95 = scmp.ne.s32.totalorder %s83, %s84
    %p96 = scmp.eq.s32.totalorder %s18, 3
    %p97 = por %p95, %p96
    %p99 = scmp.ne.s32.totalorder %s84, %s98
    %p100 = scmp.eq.s32.totalorder %s18, 0
    %p101 = por %p99, %p100
    %s103 = sadd.s32 %s102, 1
    %p106 = scmp.eq.s32.totalorder %s12, 3
    %p107 = scmp.ne.s32.totalorder %s102, %s104
    %p108 = scmp.eq.s32.totalorder %s12, 0
    %p109 = por %p107, %p108
    %p110 = scmp.ne.s32.totalorder %s102, %s104
    %p111 = scmp.eq.s32.totalorder %s17, 3
    %p112 = por %p110, %p111
    %p113 = scmp.ne.s32.totalorder %s104, %s105
    %p114 = scmp.eq.s32.totalorder %s17, 0
    %p115 = por %p113, %p114
    %p116 = scmp.ne.s32.totalorder %s104, %s105
    %p117 = scmp.eq.s32.totalorder %s18, 3
    %p118 = por %p116, %p117
    %p120 = scmp.ne.s32.totalorder %s105, %s119
    %p121 = scmp.eq.s32.totalorder %s18, 0
    %p122 = por %p120, %p121
    %s123 = ssub.s32 %s19, %s31
    %s124 = ssub.s32 %s20, %s27
    %s125 = sor.u32 %s123, %s124
    %p126 = scmp.eq.s32.totalorder %s125, 0
    %s128 = sadd.s32 %s127, 1
    %s129 = scalar_select %p126, %s127, %s128
    %p132 = pneg %p126
    %p133 = scmp.eq.s32.totalorder %s12, 3
    %p134 = por %p132, %p133
    %p135 = scmp.ne.s32.totalorder %s127, %s130
    %p136 = scmp.eq.s32.totalorder %s12, 0
    %p137 = por %p135, %p136
    %p138 = scmp.ne.s32.totalorder %s127, %s130
    %p139 = scmp.eq.s32.totalorder %s17, 3
    %p140 = por %p138, %p139
    %p141 = scmp.ne.s32.totalorder %s130, %s131
    %p142 = scmp.eq.s32.totalorder %s17, 0
    %p143 = por %p141, %p142
    %p144 = scmp.ne.s32.totalorder %s130, %s131
    %p145 = scmp.eq.s32.totalorder %s18, 3
    %p146 = por %p144, %p145
    %p148 = scmp.ne.s32.totalorder %s131, %s147
    %p149 = scmp.eq.s32.totalorder %s18, 0
    %p150 = por %p148, %p149
    %s151 = ssub.s32 %s19, %s31
    %s152 = ssub.s32 %s20, %s27
    %s153 = sor.u32 %s151, %s152
    %p154 = scmp.eq.s32.totalorder %s153, 0
    %s156 = sadd.s32 %s155, 1
    %s157 = scalar_select %p154, %s155, %s156
    %p160 = pneg %p154
    %p161 = scmp.eq.s32.totalorder %s12, 3
    %p162 = por %p160, %p161
    %p163 = scmp.ne.s32.totalorder %s155, %s158
    %p164 = scmp.eq.s32.totalorder %s12, 0
    %p165 = por %p163, %p164
    %p166 = scmp.ne.s32.totalorder %s155, %s158
    %p167 = scmp.eq.s32.totalorder %s17, 3
    %p168 = por %p166, %p167
    %p169 = scmp.ne.s32.totalorder %s158, %s159
    %p170 = scmp.eq.s32.totalorder %s17, 0
    %p171 = por %p169, %p170
    %p172 = scmp.ne.s32.totalorder %s158, %s159
    %p173 = scmp.eq.s32.totalorder %s18, 3
    %p174 = por %p172, %p173
    %p176 = scmp.ne.s32.totalorder %s159, %s175
    %p177 = scmp.eq.s32.totalorder %s18, 0
    %p178 = por %p176, %p177
    %p179 = scmp.le.s32.totalorder 1, %s12
    %p180 = scmp.lt.s32.totalorder %s12, 5
    %p181 = pnand %p179, %p180
    %p182 = pneg %p181
    // Predicated region
    $region9: #{upsample_conv_forward.4} parent=5 // pred_check
      _
    $region10: #{upsample_conv_forward.4} parent=5 // pred_check_branch
      %184 = sbr.rel (%p181) target = $region12
    $region11: #{upsample_conv_forward.4} parent=5 // pred_region
      %s185 = ssub.s32 %s12, 1
      // Predicated region
      $region13: #{upsample_conv_forward.4} parent=11 // pred_check
        %p186 = pneg %p73
      $region14: #{upsample_conv_forward.4} parent=11 // pred_check_branch
        %188 = sbr.rel (%p186) target = $region16
      $region15: #{upsample_conv_forward.4} parent=11 // pred_region
        _
      $region16: #{upsample_conv_forward.4} parent=11 // pred_fallthru
        _
      // Predicated region
      $region17: #{upsample_conv_forward.4} parent=11 // pred_check
        %p189 = pneg %p94
      $region18: #{upsample_conv_forward.4} parent=11 // pred_check_branch
        %191 = sbr.rel (%p189) target = $region20
      $region19: #{upsample_conv_forward.4} parent=11 // pred_region
        _
      $region20: #{upsample_conv_forward.4} parent=11 // pred_fallthru
        _
      // Predicated region
      $region21: #{upsample_conv_forward.4} parent=11 // pred_check
        %p192 = pneg %p115
      $region22: #{upsample_conv_forward.4} parent=11 // pred_check_branch
        %194 = sbr.rel (%p192) target = $region24
      $region23: #{upsample_conv_forward.4} parent=11 // pred_region
        _
      $region24: #{upsample_conv_forward.4} parent=11 // pred_fallthru
        _
    $region12: #{upsample_conv_forward.4} parent=5 // pred_fallthru
      _
    %p195 = scmp.lt.s32.totalorder %s12, 4
    // Predicated region
    $region25: #{upsample_conv_forward.4} parent=5 // pred_check
      %p196 = pneg %p195
    $region26: #{upsample_conv_forward.4} parent=5 // pred_check_branch
      %198 = sbr.rel (%p196) target = $region28
    $region27: #{upsample_conv_forward.4} parent=5 // pred_region
      // Predicated region
      $region29: #{upsample_conv_forward.4} parent=27 // pred_check
        %p199 = pneg %p46
      $region30: #{upsample_conv_forward.4} parent=27 // pred_check_branch
        %201 = sbr.rel (%p199) target = $region32
      $region31: #{upsample_conv_forward.4} parent=27 // pred_region
        %p202 = scmp.lt.s32.totalorder %s19, 1
        %s203 = scalar_select %p202, %s19, 1
        %p204 = scmp.lt.s32.totalorder %s20, 1
        %s205 = scalar_select %p204, %s20, 1
        %s206 = smul.addr %s205, 5
        %s207 = smul.addr %s203, 10
        %s208 = sadd.s32 %s206, %s207
        %s209 = smul.addr %s208, 4
        %s210 = scalar_lea.vmem %s0, %s209
      $region32: #{upsample_conv_forward.4} parent=27 // pred_fallthru
        _
    $region28: #{upsample_conv_forward.4} parent=5 // pred_fallthru
      _
    %p211 = scmp.le.s32.totalorder 1, %s12
    %p212 = scmp.lt.s32.totalorder %s12, 5
    %p213 = pnand %p211, %p212
    %p214 = pneg %p213
    // Predicated region
    $region33: #{upsample_conv_forward.4} parent=5 // pred_check
      _
    $region34: #{upsample_conv_forward.4} parent=5 // pred_check_branch
      %216 = sbr.rel (%p213) target = $region36
    $region35: #{upsample_conv_forward.4} parent=5 // pred_region
      %s217 = ssub.s32 %s12, 1
      %p218 = scmp.lt.s32.totalorder %s21, 1
      %s219 = scalar_select %p218, %s21, 1
      %p220 = scmp.lt.s32.totalorder %s22, 1
      %s221 = scalar_select %p220, %s22, 1
      %s222 = smul.addr %s221, 5
      %s223 = smul.addr %s219, 10
      %s224 = sadd.s32 %s222, %s223
      %s225 = smul.addr %s224, 4
      %s226 = scalar_lea.vmem %s0, %s225
      %p227 = pneg %p52
      %p228 = pneg %p49
      %p229 = pneg %p73
      %p230 = pneg %p70
      %p231 = pneg %p94
      %p232 = pneg %p91
      %p233 = pneg %p115
      %p234 = pneg %p112
      %p235 = pneg %p143
      %p236 = pneg %p140
      %s237 = smul.u32 4, %s22
      %p238 = scmp.lt.s32.totalorder %s21, 1
      %s239 = scalar_select %p238, %s21, 1
      %p240 = scmp.lt.s32.totalorder %s237, 7
      %s241 = scalar_select %p240, %s237, 7
      %s242 = smul.addr %s239, 8
      %s243 = sadd.s32 %s241, %s242
      %s244 = smul.addr %s243, 4
      %s245 = scalar_lea.vmem %s4, %s244
      %p246 = pneg %p171
      %p247 = pneg %p168
      %p248 = scmp.lt.s32.totalorder %s21, 1
      %s249 = scalar_select %p248, %s21, 1
      %p250 = scmp.lt.s32.totalorder %s22, 1
      %s251 = scalar_select %p250, %s22, 1
      %s252 = smul.addr %s249, 2
      %s253 = sadd.s32 %s251, %s252
      %s254 = smul.addr %s253, 8
      %s255 = scalar_lea.vmem %s5, %s254
      %p256 = scmp.lt.s32.totalorder %s21, 1
      %s257 = scalar_select %p256, %s21, 1
      %p258 = scmp.lt.s32.totalorder %s22, 1
      %s259 = scalar_select %p258, %s22, 1
      %s260 = smul.addr %s259, 5
      %s261 = smul.addr %s257, 10
      %s262 = sadd.s32 %s260, %s261
      %s263 = smul.addr %s262, 4
      %s264 = scalar_lea.vmem %s0, %s263
      %s265 = smul.u32 4, %s22
      %p266 = scmp.lt.s32.totalorder %s21, 1
      %s267 = scalar_select %p266, %s21, 1
      %p268 = scmp.lt.s32.totalorder %s265, 7
      %s269 = scalar_select %p268, %s265, 7
      %s270 = smul.addr %s267, 8
      %s271 = sadd.s32 %s269, %s270
      %s272 = smul.addr %s271, 4
      %s273 = scalar_lea.vmem %s4, %s272
      %s274 = smul.u32 4, %s22
      %p275 = scmp.lt.s32.totalorder %s21, 1
      %s276 = scalar_select %p275, %s21, 1
      %p277 = scmp.lt.s32.totalorder %s22, 1
      %s278 = scalar_select %p277, %s22, 1
      %s279 = smul.addr %s276, 2
      %s280 = sadd.s32 %s278, %s279
      %s281 = smul.addr %s280, 8
      %s282 = scalar_lea.vmem %s5, %s281
      %v284 = vld [vmem:[%s264] sm:$0xff]
      %v285 = vld [vmem:[%s264 + $0x8] sm:$0xff]
      %v286 = vld [vmem:[%s264 + $0x10] sm:$0xf]
      %v287 = vunpack.c.l.bf16 %v284
      %v288 = vunpack.c.h.bf16 %v284
      %v289 = vunpack.c.l.bf16 %v285
      %v290 = vunpack.c.h.bf16 %v285
      %v291 = vunpack.c.l.bf16 %v286
      %v292 = vld [vmem:[%s2] sm:$0xff]
      %294 = vset.pattern.permute.xlu0 0
      %295 = vperm.xlu0 %294, %v292
      %v296 = vpop.permute.xlu0 %295
      %v298 = vmul.f32 %v287, %v296
      %v299 = vmul.f32 %v288, %v296
      %v300 = vmul.f32 %v289, %v296
      %v301 = vmul.f32 %v290, %v296
      %v302 = vmul.f32 %v291, %v296
      %v303 = vld [vmem:[%s3] sm:$0xff]
      %305 = vset.pattern.permute.xlu0 0
      %306 = vperm.xlu0 %305, %v303
      %v307 = vpop.permute.xlu0 %306
      %v309 = vadd.f32 %v298, %v307
      %v310 = vadd.f32 %v299, %v307
      %v311 = vadd.f32 %v300, %v307
      %v312 = vadd.f32 %v301, %v307
      %v313 = vadd.f32 %v302, %v307
      %v314 = vmax.f32 %v309, 0.0
      %v315 = vmax.f32 %v310, 0.0
      %v316 = vmax.f32 %v311, 0.0
      %v317 = vmax.f32 %v312, 0.0
      %v318 = vmax.f32 %v313, 0.0
      %v319 = vlaneseq
      %v320 = vand.u32 %v319, 127
      %v321 = vadd.s32 %v320, 128
      %v322 = vadd.s32 %v320, 256
      %v323 = vadd.s32 %v320, 384
      %v324 = vadd.s32 %v320, 512
      %s325 = smul.u32 %s22, 512
      %v326 = vstv %s325
      %v327 = vadd.s32 %v320, %v326
      %v328 = vadd.s32 %v321, %v326
      %v329 = vadd.s32 %v322, %v326
      %v330 = vadd.s32 %v323, %v326
      %v331 = vadd.s32 %v324, %v326
      %vm332 = vcmp.ge.s32.totalorder %v327, 33
      %vm333 = vcmp.ge.s32.totalorder %v328, 33
      %vm334 = vcmp.ge.s32.totalorder %v329, 33
      %vm335 = vcmp.ge.s32.totalorder %v330, 33
      %vm336 = vcmp.ge.s32.totalorder %v331, 33
      %vm337 = vcmp.lt.s32.totalorder %v327, 1057
      %vm338 = vcmp.lt.s32.totalorder %v328, 1057
      %vm339 = vcmp.lt.s32.totalorder %v329, 1057
      %vm340 = vcmp.lt.s32.totalorder %v330, 1057
      %vm341 = vcmp.lt.s32.totalorder %v331, 1057
      %vm342 = vmand %vm332, %vm337
      %vm343 = vmand %vm333, %vm338
      %vm344 = vmand %vm334, %vm339
      %vm345 = vmand %vm335, %vm340
      %vm346 = vmand %vm336, %vm341
      %v347 = vsel %vm342, 1, 0
      %v348 = vsel %vm343, 1, 0
      %v349 = vsel %vm344, 1, 0
      %v350 = vsel %vm345, 1, 0
      %v351 = vsel %vm346, 1, 0
      %v352 = vcvt.s32.f32 %v347
      %v353 = vcvt.s32.f32 %v348
      %v354 = vcvt.s32.f32 %v349
      %v355 = vcvt.s32.f32 %v350
      %v356 = vcvt.s32.f32 %v351
      %v357 = vmul.f32 %v314, %v352
      %v358 = vmul.f32 %v315, %v353
      %v359 = vmul.f32 %v316, %v354
      %v360 = vmul.f32 %v317, %v355
      %v361 = vmul.f32 %v318, %v356
      %v362 = vpack.c.bf16 %v357, %v357
      %v363 = vpack.c.bf16 %v358, %v358
      %v364 = vpack.c.bf16 %v359, %v359
      %v365 = vpack.c.bf16 %v360, %v360
      %v366 = vpack.c.bf16 %v361, %v361
      %v367 = vld [vmem:[%s1] sm:$0xf]
      %vm368 = vcmp.lt.s32.totalorder %v320, 0
      %v369 = vsub.s32 0, %v320
      %v370 = vsel %vm368, %v369, %v320
      %v371 = vshrl.u32 %v370, 5
      %v372 = vand.u32 %v370, 31
      %v373 = vsub.s32 0, %v372
      %v374 = vsel %vm368, %v373, %v372
      %vm375 = vcmp.lt.s32.totalorder %v321, 0
      %v376 = vsub.s32 0, %v321
      %v377 = vsel %vm375, %v376, %v321
      %v378 = vshrl.u32 %v377, 5
      %v379 = vand.u32 %v377, 31
      %v380 = vsub.s32 0, %v379
      %v381 = vsel %vm375, %v380, %v379
      %vm382 = vcmp.lt.s32.totalorder %v322, 0
      %v383 = vsub.s32 0, %v322
      %v384 = vsel %vm382, %v383, %v322
      %v385 = vshrl.u32 %v384, 5
      %v386 = vand.u32 %v384, 31
      %v387 = vsub.s32 0, %v386
      %v388 = vsel %vm382, %v387, %v386
      %vm389 = vcmp.lt.s32.totalorder %v323, 0
      %v390 = vsub.s32 0, %v323
      %v391 = vsel %vm389, %v390, %v323
      %v392 = vshrl.u32 %v391, 5
      %v393 = vand.u32 %v391, 31
      %v394 = vsub.s32 0, %v393
      %v395 = vsel %vm389, %v394, %v393
      %vm396 = vcmp.ne.s32.totalorder %v374, 0
      %vm397 = vcmp.ne.s32.totalorder %v381, 0
      %vm398 = vcmp.ne.s32.totalorder %v388, 0
      %vm399 = vcmp.ne.s32.totalorder %v395, 0
      %vm400 = vcmp.lt.s32.totalorder %v374, 0
      %vm401 = vcmp.lt.s32.totalorder %v381, 0
      %vm402 = vcmp.lt.s32.totalorder %v388, 0
      %vm403 = vcmp.lt.s32.totalorder %v395, 0
      %vm404 = vmand %vm400, %vm396
      %vm405 = vmand %vm401, %vm397
      %vm406 = vmand %vm402, %vm398
      %vm407 = vmand %vm403, %vm399
      %v408 = vadd.s32 %v374, 32
      %v409 = vadd.s32 %v381, 32
      %v410 = vadd.s32 %v388, 32
      %v411 = vadd.s32 %v395, 32
      %v412 = vsel %vm404, %v408, %v374
      %v413 = vsel %vm405, %v409, %v381
      %v414 = vsel %vm406, %v410, %v388
      %v415 = vsel %vm407, %v411, %v395
      %vm416 = vcmp.ne.s32.totalorder %v412, 0
      %vm417 = vcmp.ne.s32.totalorder %v413, 0
      %vm418 = vcmp.ne.s32.totalorder %v414, 0
      %vm419 = vcmp.ne.s32.totalorder %v415, 0
      %v420 = vsel %vm416, 1, 0
      %v421 = vsel %vm417, 1, 0
      %v422 = vsel %vm418, 1, 0
      %v423 = vsel %vm419, 1, 0
      %v424 = vcvt.s32.f32 %v420
      %v425 = vcvt.s32.f32 %v421
      %v426 = vcvt.s32.f32 %v422
      %v427 = vcvt.s32.f32 %v423
      %v428 = vpack.c.bf16 %v424, %v424
      %v429 = vpack.c.bf16 %v425, %v425
      %v430 = vpack.c.bf16 %v426, %v426
      %v431 = vpack.c.bf16 %v427, %v427
      %vm432 = vcmp.ne.s32.totalorder %v412, 31
      %vm433 = vcmp.ne.s32.totalorder %v413, 31
      %vm434 = vcmp.ne.s32.totalorder %v414, 31
      %vm435 = vcmp.ne.s32.totalorder %v415, 31
      %v436 = vsel %vm432, 1, 0
      %v437 = vsel %vm433, 1, 0
      %v438 = vsel %vm434, 1, 0
      %v439 = vsel %vm435, 1, 0
      %v440 = vcvt.s32.f32 %v436
      %v441 = vcvt.s32.f32 %v437
      %v442 = vcvt.s32.f32 %v438
      %v443 = vcvt.s32.f32 %v439
      %v444 = vpack.c.bf16 %v440, %v440
      %v445 = vpack.c.bf16 %v441, %v441
      %v446 = vpack.c.bf16 %v442, %v442
      %v447 = vpack.c.bf16 %v443, %v443
      %v448 = vmul.bf16 %v362, %v428
      %v449 = vmul.bf16 %v363, %v429
      %v450 = vmul.bf16 %v364, %v430
      %v451 = vmul.bf16 %v365, %v431
      %456 = vrot.lane.b32.xlu0 %v444, 2
      %v457 = vpop.permute.xlu0 %456
      %458 = vrot.lane.b32.xlu0 %v445, 2
      %v459 = vpop.permute.xlu0 %458
      %460 = vrot.lane.b32.xlu0 %v446, 2
      %v461 = vpop.permute.xlu0 %460
      %462 = vrot.lane.b32.xlu0 %v447, 2
      %v463 = vpop.permute.xlu0 %462
      %vm464 = vcmask 15360
      %v465 = vsel %vm464, %v457, %v459
      %v466 = vsel %vm464, %v459, %v461
      %v467 = vsel %vm464, %v461, %v463
      %v473 = vmul.bf16 %v362, %v457
      %v474 = vmul.bf16 %v363, %v465
      %v475 = vmul.bf16 %v364, %v466
      %v476 = vmul.bf16 %v365, %v467
      %v477 = vmul.bf16 %v366, %v463
      %482 = vrot.lane.b32.xlu0 %v428, 32
      %v483 = vpop.permute.xlu0 %482
      %484 = vrot.lane.b32.xlu0 %v429, 32
      %v485 = vpop.permute.xlu0 %484
      %486 = vrot.lane.b32.xlu0 %v430, 32
      %v487 = vpop.permute.xlu0 %486
      %488 = vrot.lane.b32.xlu0 %v431, 32
      %v489 = vpop.permute.xlu0 %488
      %vm490 = vcmask 261120
      %v491 = vsel %vm490, %v483, %v485
      %v492 = vsel %vm490, %v485, %v487
      %v493 = vsel %vm490, %v487, %v489
      %v499 = vmul.bf16 %v362, %v483
      %v500 = vmul.bf16 %v363, %v491
      %v501 = vmul.bf16 %v364, %v492
      %v502 = vmul.bf16 %v365, %v493
      %v503 = vmul.bf16 %v366, %v489
      %504 = vrot.lane.b32.xlu0 %v444, 34
      %v505 = vpop.permute.xlu0 %504
      %506 = vrot.lane.b32.xlu0 %v445, 34
      %v507 = vpop.permute.xlu0 %506
      %508 = vrot.lane.b32.xlu0 %v446, 34
      %v509 = vpop.permute.xlu0 %508
      %510 = vrot.lane.b32.xlu0 %v447, 34
      %v511 = vpop.permute.xlu0 %510
      %vm512 = vcmask 277504
      %v513 = vsel %vm512, %v505, %v507
      %v514 = vsel %vm512, %v507, %v509
      %v515 = vsel %vm512, %v509, %v511
      %v521 = vmul.bf16 %v362, %v505
      %v522 = vmul.bf16 %v363, %v513
      %v523 = vmul.bf16 %v364, %v514
      %v524 = vmul.bf16 %v365, %v515
      %v525 = vmul.bf16 %v366, %v511
      %526 = vrot.lane.b32.xlu0 %v428, 64
      %v527 = vpop.permute.xlu0 %526
      %528 = vrot.lane.b32.xlu0 %v429, 64
      %v529 = vpop.permute.xlu0 %528
      %530 = vrot.lane.b32.xlu0 %v430, 64
      %v531 = vpop.permute.xlu0 %530
      %532 = vrot.lane.b32.xlu0 %v431, 64
      %v533 = vpop.permute.xlu0 %532
      %vm534 = vcmask 523264
      %v535 = vsel %vm534, %v527, %v529
      %v536 = vsel %vm534, %v529, %v531
      %v537 = vsel %vm534, %v531, %v533
      %v543 = vmul.bf16 %v362, %v527
      %v544 = vmul.bf16 %v363, %v535
      %v545 = vmul.bf16 %v364, %v536
      %v546 = vmul.bf16 %v365, %v537
      %v547 = vmul.bf16 %v366, %v533
      %548 = vrot.lane.b32.xlu0 %v444, 66
      %v549 = vpop.permute.xlu0 %548
      %550 = vrot.lane.b32.xlu0 %v445, 66
      %v551 = vpop.permute.xlu0 %550
      %552 = vrot.lane.b32.xlu0 %v446, 66
      %v553 = vpop.permute.xlu0 %552
      %554 = vrot.lane.b32.xlu0 %v447, 66
      %v555 = vpop.permute.xlu0 %554
      %vm556 = vcmask 539648
      %v557 = vsel %vm556, %v549, %v551
      %v558 = vsel %vm556, %v551, %v553
      %v559 = vsel %vm556, %v553, %v555
      %v565 = vmul.bf16 %v362, %v549
      %v566 = vmul.bf16 %v363, %v557
      %v567 = vmul.bf16 %v364, %v558
      %v568 = vmul.bf16 %v365, %v559
      %v569 = vmul.bf16 %v366, %v555
      %v575 = vrot.slane %v362, 4
      %v576 = vrot.slane %v363, 4
      %v577 = vrot.slane %v364, 4
      %v578 = vrot.slane %v365, 4
      %v579 = vrot.slane %v366, 4
      %580 = vrot.lane.b32.xlu0 %v575, 127
      %v581 = vpop.permute.xlu0 %580
      %582 = vrot.lane.b32.xlu0 %v576, 127
      %v583 = vpop.permute.xlu0 %582
      %584 = vrot.lane.b32.xlu0 %v577, 127
      %v585 = vpop.permute.xlu0 %584
      %586 = vrot.lane.b32.xlu0 %v578, 127
      %v587 = vpop.permute.xlu0 %586
      %588 = vrot.lane.b32.xlu0 %v579, 127
      %v589 = vpop.permute.xlu0 %588
      %vm590 = vcmask 1039360
      %v591 = vsel %vm590, %v581, %v583
      %v592 = vsel %vm590, %v583, %v585
      %v593 = vsel %vm590, %v585, %v587
      %v594 = vsel %vm590, %v587, %v589
      %600 = vrot.lane.b32.xlu0 %v473, 126
      %v601 = vpop.permute.xlu0 %600
      %602 = vrot.lane.b32.xlu0 %v474, 126
      %v603 = vpop.permute.xlu0 %602
      %604 = vrot.lane.b32.xlu0 %v475, 126
      %v605 = vpop.permute.xlu0 %604
      %606 = vrot.lane.b32.xlu0 %v476, 126
      %v607 = vpop.permute.xlu0 %606
      %608 = vrot.lane.b32.xlu0 %v477, 126
      %v609 = vpop.permute.xlu0 %608
      %vm610 = vcmask 1031168
      %v611 = vsel %vm610, %v601, %v603
      %v612 = vsel %vm610, %v603, %v605
      %v613 = vsel %vm610, %v605, %v607
      %v614 = vsel %vm610, %v607, %v609
      %v620 = vrot.slane %v499, 4
      %v621 = vrot.slane %v500, 4
      %v622 = vrot.slane %v501, 4
      %v623 = vrot.slane %v502, 4
      %v624 = vrot.slane %v503, 4
      %625 = vrot.lane.b32.xlu0 %v620, 96
      %v626 = vpop.permute.xlu0 %625
      %627 = vrot.lane.b32.xlu0 %v621, 96
      %v628 = vpop.permute.xlu0 %627
      %629 = vrot.lane.b32.xlu0 %v622, 96
      %v630 = vpop.permute.xlu0 %629
      %631 = vrot.lane.b32.xlu0 %v623, 96
      %v632 = vpop.permute.xlu0 %631
      %633 = vrot.lane.b32.xlu0 %v624, 96
      %v634 = vpop.permute.xlu0 %633
      %vm635 = vcmask 785408
      %v636 = vsel %vm635, %v626, %v628
      %v637 = vsel %vm635, %v628, %v630
      %v638 = vsel %vm635, %v630, %v632
      %v639 = vsel %vm635, %v632, %v634
      %640 = vrot.lane.b32.xlu0 %v362, 95
      %v641 = vpop.permute.xlu0 %640
      %642 = vrot.lane.b32.xlu0 %v363, 95
      %v643 = vpop.permute.xlu0 %642
      %644 = vrot.lane.b32.xlu0 %v364, 95
      %v645 = vpop.permute.xlu0 %644
      %646 = vrot.lane.b32.xlu0 %v365, 95
      %v647 = vpop.permute.xlu0 %646
      %648 = vrot.lane.b32.xlu0 %v366, 95
      %v649 = vpop.permute.xlu0 %648
      %vm650 = vcmask 777216
      %v651 = vsel %vm650, %v641, %v643
      %v652 = vsel %vm650, %v643, %v645
      %v653 = vsel %vm650, %v645, %v647
      %v654 = vsel %vm650, %v647, %v649
      %v660 = vrot.slane %v521, 4
      %v661 = vrot.slane %v522, 4
      %v662 = vrot.slane %v523, 4
      %v663 = vrot.slane %v524, 4
      %v664 = vrot.slane %v525, 4
      %665 = vrot.lane.b32.xlu0 %v660, 94
      %v666 = vpop.permute.xlu0 %665
      %667 = vrot.lane.b32.xlu0 %v661, 94
      %v668 = vpop.permute.xlu0 %667
      %669 = vrot.lane.b32.xlu0 %v662, 94
      %v670 = vpop.permute.xlu0 %669
      %671 = vrot.lane.b32.xlu0 %v663, 94
      %v672 = vpop.permute.xlu0 %671
      %673 = vrot.lane.b32.xlu0 %v664, 94
      %v674 = vpop.permute.xlu0 %673
      %vm675 = vcmask 769024
      %v676 = vsel %vm675, %v666, %v668
      %v677 = vsel %vm675, %v668, %v670
      %v678 = vsel %vm675, %v670, %v672
      %v679 = vsel %vm675, %v672, %v674
      %685 = vrot.lane.b32.xlu0 %v543, 64
      %v686 = vpop.permute.xlu0 %685
      %687 = vrot.lane.b32.xlu0 %v544, 64
      %v688 = vpop.permute.xlu0 %687
      %689 = vrot.lane.b32.xlu0 %v545, 64
      %v690 = vpop.permute.xlu0 %689
      %691 = vrot.lane.b32.xlu0 %v546, 64
      %v692 = vpop.permute.xlu0 %691
      %693 = vrot.lane.b32.xlu0 %v547, 64
      %v694 = vpop.permute.xlu0 %693
      %v695 = vsel %vm534, %v686, %v688
      %v696 = vsel %vm534, %v688, %v690
      %v697 = vsel %vm534, %v690, %v692
      %v698 = vsel %vm534, %v692, %v694
      %699 = vrot.lane.b32.xlu0 %v575, 63
      %v700 = vpop.permute.xlu0 %699
      %701 = vrot.lane.b32.xlu0 %v576, 63
      %v702 = vpop.permute.xlu0 %701
      %703 = vrot.lane.b32.xlu0 %v577, 63
      %v704 = vpop.permute.xlu0 %703
      %705 = vrot.lane.b32.xlu0 %v578, 63
      %v706 = vpop.permute.xlu0 %705
      %707 = vrot.lane.b32.xlu0 %v579, 63
      %v708 = vpop.permute.xlu0 %707
      %vm709 = vcmask 515072
      %v710 = vsel %vm709, %v700, %v702
      %v711 = vsel %vm709, %v702, %v704
      %v712 = vsel %vm709, %v704, %v706
      %v713 = vsel %vm709, %v706, %v708
      %719 = vrot.lane.b32.xlu0 %v565, 62
      %v720 = vpop.permute.xlu0 %719
      %721 = vrot.lane.b32.xlu0 %v566, 62
      %v722 = vpop.permute.xlu0 %721
      %723 = vrot.lane.b32.xlu0 %v567, 62
      %v724 = vpop.permute.xlu0 %723
      %725 = vrot.lane.b32.xlu0 %v568, 62
      %v726 = vpop.permute.xlu0 %725
      %727 = vrot.lane.b32.xlu0 %v569, 62
      %v728 = vpop.permute.xlu0 %727
      %vm729 = vcmask 506880
      %v730 = vsel %vm729, %v720, %v722
      %v731 = vsel %vm729, %v722, %v724
      %v732 = vsel %vm729, %v724, %v726
      %v733 = vsel %vm729, %v726, %v728
      %vm734 = vcmask 1043456
      %v737 = vsel %vm734, %v448, %v591
      %v741 = vsel %vm734, %v449, %v592
      %v745 = vsel %vm734, %v450, %v593
      %v749 = vsel %vm734, %v451, %v594
      %v753 = vsel %vm734, %v611, %v636
      %v757 = vsel %vm734, %v612, %v637
      %v761 = vsel %vm734, %v613, %v638
      %v765 = vsel %vm734, %v614, %v639
      %v769 = vsel %vm734, %v651, %v676
      %v773 = vsel %vm734, %v652, %v677
      %v777 = vsel %vm734, %v653, %v678
      %v781 = vsel %vm734, %v654, %v679
      %v785 = vsel %vm734, %v695, %v710
      %v789 = vsel %vm734, %v696, %v711
      %v793 = vsel %vm734, %v697, %v712
      %v797 = vsel %vm734, %v698, %v713
      %vm799 = vcmask 588800
      %v801 = vsel %vm799, %v367, 0
      %v804 = vsel %vm734, %v730, 0
      %v807 = vsel %vm734, %v731, 0
      %v810 = vsel %vm734, %v732, 0
      %v813 = vsel %vm734, %v733, 0
      %815 = vmatprep.subr.bf16.mxu0 0
      %816 = vmatpush1.bf16.msra.mxu0 0
      %817 = vmatprep.subr.bf16.mxu0 0
      %818 = vmatpush1.bf16.msra.mxu0 0
      %819 = vmatprep.subr.bf16.mxu0 0
      %820 = vmatpush1.bf16.msra.mxu0 0
      %821 = vmatprep.subr.bf16.mxu0 %v807
      %822 = vmatpush1.bf16.msra.mxu0 %v804
      %823 = vmatprep.subr.bf16.mxu0 %v789
      %824 = vmatpush1.bf16.msra.mxu0 %v785
      %825 = vmatprep.subr.bf16.mxu0 %v773
      %826 = vmatpush1.bf16.msra.mxu0 %v769
      %827 = vmatprep.subr.bf16.mxu0 %v757
      %828 = vmatpush1.bf16.msra.mxu0 %v753
      %829 = vmatprep.subr.bf16.mxu0 %v741
      %830 = vmatpush1.bf16.msra.mxu0 %v737
      %831 = vmatprep.subr.bf16.mxu0 0
      %832 = vmatpush2.bf16.msra.mxu0 0
      %833 = vmatprep.subr.bf16.mxu0 0
      %834 = vmatpush2.bf16.msra.mxu0 0
      %835 = vmatprep.subr.bf16.mxu0 0
      %836 = vmatpush2.bf16.msra.mxu0 0
      %837 = vmatprep.subr.bf16.mxu0 0
      %838 = vmatpush2.bf16.msra.mxu0 0
      %839 = vmatprep.subr.bf16.mxu0 0
      %840 = vmatpush2.bf16.msra.mxu0 0
      %841 = vmatprep.subr.bf16.mxu0 0
      %842 = vmatpush2.bf16.msra.mxu0 0
      %843 = vmatprep.subr.bf16.mxu0 0
      %844 = vmatpush2.bf16.msra.mxu0 0
      %845 = vmatprep.subr.bf16.mxu0 0
      %846 = vmatpush2.bf16.msra.mxu0 0
      %847 = vmatprep.mubr.bf16.mxu0 0
      %848 = vmatmul.mubr.bf16.gmra.mxu0 %v801
      %v849 = vpop.f32.mrf.mxu0
      %v850 = vadd.f32 0.0, %v849
      %v851 = vpop.f32.mrf.mxu0
      %v852 = vadd.f32 0.0, %v851
      %v853 = vpop.f32.mrf.mxu0
      %v854 = vpop.f32.mrf.mxu0
      %855 = vdwg.mxu0
      %856 = vmatprep.subr.bf16.mxu0 0
      %857 = vmatpush1.bf16.msra.mxu0 0
      %858 = vmatprep.subr.bf16.mxu0 0
      %859 = vmatpush1.bf16.msra.mxu0 0
      %860 = vmatprep.subr.bf16.mxu0 0
      %861 = vmatpush1.bf16.msra.mxu0 0
      %862 = vmatprep.subr.bf16.mxu0 %v813
      %863 = vmatpush1.bf16.msra.mxu0 %v810
      %864 = vmatprep.subr.bf16.mxu0 %v797
      %865 = vmatpush1.bf16.msra.mxu0 %v793
      %866 = vmatprep.subr.bf16.mxu0 %v781
      %867 = vmatpush1.bf16.msra.mxu0 %v777
      %868 = vmatprep.subr.bf16.mxu0 %v765
      %869 = vmatpush1.bf16.msra.mxu0 %v761
      %870 = vmatprep.subr.bf16.mxu0 %v749
      %871 = vmatpush1.bf16.msra.mxu0 %v745
      %872 = vmatprep.subr.bf16.mxu0 0
      %873 = vmatpush2.bf16.msra.mxu0 0
      %874 = vmatprep.subr.bf16.mxu0 0
      %875 = vmatpush2.bf16.msra.mxu0 0
      %876 = vmatprep.subr.bf16.mxu0 0
      %877 = vmatpush2.bf16.msra.mxu0 0
      %878 = vmatprep.subr.bf16.mxu0 0
      %879 = vmatpush2.bf16.msra.mxu0 0
      %880 = vmatprep.subr.bf16.mxu0 0
      %881 = vmatpush2.bf16.msra.mxu0 0
      %882 = vmatprep.subr.bf16.mxu0 0
      %883 = vmatpush2.bf16.msra.mxu0 0
      %884 = vmatprep.subr.bf16.mxu0 0
      %885 = vmatpush2.bf16.msra.mxu0 0
      %886 = vmatprep.subr.bf16.mxu0 0
      %887 = vmatpush2.bf16.msra.mxu0 0
      %888 = vmatprep.mubr.bf16.mxu0 0
      %889 = vmatmul.mubr.bf16.gmra.mxu0 %v801
      %v890 = vpop.f32.mrf.mxu0
      %v891 = vadd.f32 0.0, %v890
      %v892 = vpop.f32.mrf.mxu0
      %v893 = vadd.f32 0.0, %v892
      %v894 = vpop.f32.mrf.mxu0
      %v895 = vpop.f32.mrf.mxu0
      %896 = vdwg.mxu0
      %v897 = vpack.c.bf16 %v850, %v850
      %v898 = vpack.c.bf16 %v852, %v852
      %v899 = vpack.c.bf16 %v891, %v891
      %v900 = vpack.c.bf16 %v893, %v893
      %v905 = vunpack.c.l.b16 %v897
      %v906 = vunpack.c.l.b16 %v898
      %v907 = vunpack.c.l.b16 %v899
      %v908 = vunpack.c.l.b16 %v900
      %v909 = vpack.c.b16 %v906, %v905
      %v910 = vpack.c.b16 %v908, %v907
      %913 = vst [vmem:[%s273] sm:$0xff] %v909
      %914 = vst [vmem:[%s273 + $0x8] sm:$0xff] %v910
      %v915 = vadd.f32 %v850, %v852
      %v916 = vadd.f32 %v915, %v891
      %v917 = vadd.f32 %v916, %v893
      %918 = vadd.xlane.f32.xlu0 %v917
      %v919 = vpop.xlane.xlu0 %918
      %v920 = vmul.f32 %v850, %v850
      %v921 = vmul.f32 %v852, %v852
      %v922 = vmul.f32 %v891, %v891
      %v923 = vmul.f32 %v893, %v893
      %v924 = vadd.f32 %v920, %v921
      %v925 = vadd.f32 %v924, %v922
      %v926 = vadd.f32 %v925, %v923
      %927 = vadd.xlane.f32.xlu0 %v926
      %v928 = vpop.xlane.xlu0 %927
      %vm929 = vcmask 7168
      %v930 = vsel %vm929, %v919, %v928
      %vm931 = vcmask 15360
      %932 = vst.msk [vmem:[%s282] sm:$0xff] %vm931, %v930
      %s933 = smul.u32 4, %s22
      %p934 = scmp.lt.s32.totalorder %s21, 1
      %s935 = scalar_select %p934, %s21, 1
      %p936 = scmp.lt.s32.totalorder %s933, 7
      %s937 = scalar_select %p936, %s933, 7
      %s938 = smul.addr %s935, 8
      %s939 = sadd.s32 %s937, %s938
      %s940 = smul.addr %s939, 4
      %s941 = scalar_lea.vmem %s4, %s940
      %p942 = scmp.lt.s32.totalorder %s21, 1
      %s943 = scalar_select %p942, %s21, 1
      %p944 = scmp.lt.s32.totalorder %s22, 1
      %s945 = scalar_select %p944, %s22, 1
      %s946 = smul.addr %s943, 2
      %s947 = sadd.s32 %s945, %s946
      %s948 = smul.addr %s947, 8
      %s949 = scalar_lea.vmem %s5, %s948
      // Predicated region
      $region37: #{upsample_conv_forward.4} parent=35 // pred_check
        %p950 = pneg %p140
      $region38: #{upsample_conv_forward.4} parent=35 // pred_check_branch
        %952 = sbr.rel (%p950) target = $region40
      $region39: #{upsample_conv_forward.4} parent=35 // pred_region
        %s953 = smul.u32 4, %s22
      $region40: #{upsample_conv_forward.4} parent=35 // pred_fallthru
        _
      // Predicated region
      $region41: #{upsample_conv_forward.4} parent=35 // pred_check
        %p954 = pneg %p168
      $region42: #{upsample_conv_forward.4} parent=35 // pred_check_branch
        %956 = sbr.rel (%p954) target = $region44
      $region43: #{upsample_conv_forward.4} parent=35 // pred_region
        _
      $region44: #{upsample_conv_forward.4} parent=35 // pred_fallthru
        _
    $region36: #{upsample_conv_forward.4} parent=5 // pred_fallthru
      _
    %p957 = scmp.le.s32.totalorder 2, %s12
    // Predicated region
    $region45: #{upsample_conv_forward.4} parent=5 // pred_check
      %p958 = pneg %p957
    $region46: #{upsample_conv_forward.4} parent=5 // pred_check_branch
      %960 = sbr.rel (%p958) target = $region48
    $region47: #{upsample_conv_forward.4} parent=5 // pred_region
      %s961 = ssub.s32 %s12, 2
      // Predicated region
      $region49: #{upsample_conv_forward.4} parent=47 // pred_check
        %p962 = pneg %p146
      $region50: #{upsample_conv_forward.4} parent=47 // pred_check_branch
        %964 = sbr.rel (%p962) target = $region52
      $region51: #{upsample_conv_forward.4} parent=47 // pred_region
        %s965 = smul.u32 4, %s24
        %p966 = scmp.lt.s32.totalorder %s23, 1
        %s967 = scalar_select %p966, %s23, 1
        %p968 = scmp.lt.s32.totalorder %s965, 7
        %s969 = scalar_select %p968, %s965, 7
        %s970 = smul.addr %s967, 8
        %s971 = sadd.s32 %s969, %s970
        %s972 = smul.addr %s971, 4
        %s973 = scalar_lea.vmem %s4, %s972
      $region52: #{upsample_conv_forward.4} parent=47 // pred_fallthru
        _
      // Predicated region
      $region53: #{upsample_conv_forward.4} parent=47 // pred_check
        %p974 = pneg %p174
      $region54: #{upsample_conv_forward.4} parent=47 // pred_check_branch
        %976 = sbr.rel (%p974) target = $region56
      $region55: #{upsample_conv_forward.4} parent=47 // pred_region
        %p977 = scmp.lt.s32.totalorder %s23, 1
        %s978 = scalar_select %p977, %s23, 1
        %p979 = scmp.lt.s32.totalorder %s24, 1
        %s980 = scalar_select %p979, %s24, 1
        %s981 = smul.addr %s978, 2
        %s982 = sadd.s32 %s980, %s981
        %s983 = smul.addr %s982, 8
        %s984 = scalar_lea.vmem %s5, %s983
      $region56: #{upsample_conv_forward.4} parent=47 // pred_fallthru
        _
    $region48: #{upsample_conv_forward.4} parent=5 // pred_fallthru
      _
  $region6: #{upsample_conv_forward.4} parent=0 // loop_footer
    %s16 = sadd.s32 1, %s12
  $region7: #{upsample_conv_forward.4} parent=0 // loop_footer_branch
    %11 = sbr.rel target = $region3
  $region8: #{upsample_conv_forward.4} parent=0 // loop_exit
    _

</llo_original>
